<compile_context>
chip_gen: v7x
topology: tpu7x:2x2x1
jax: 0.10.0
libtpu: 0.0.40
codegen_flags: <defaults>
</compile_context>

<pallas_src>
import jax
import jax.numpy as jnp
from jax.experimental import pallas as pl
from jax.experimental.pallas import tpu as pltpu

# ----------------------- static configuration ------------------------------
B = 2                    # batch
IN_FEATURES = 1024       # module default in_features
HIDDEN = 1024            # module default hidden_features
NUM_CLASSES = 2          # classifier head
ADV_SIZE = 128           # adversary_size
USED_CLASSES = 2         # discriminator output dim = used_classes - 1 = 1
HEAD_W = 8               # packed head width: cols [0:2]=Y_logits, col 2=A, rest 0
MODEL_VAR = "laftr-dp"

# TODO(synk): only the default model_var='laftr-dp' path is implemented; the
# 'laftr-eqodd' variant concatenates Y[:, 0:1] onto Z before the discriminator
# (fold would be invalid there).
# TODO(synk): the Y=None path of forward() (return (Y_logits, Z)) is not
# exposed; Z never leaves VMEM in this fused kernel.


# ----------------------------- Pallas kernel --------------------------------
def laftr_kernel(x_ref, w1q_ref, s1_ref, b1_ref, wh_ref, bh_ref, out_ref):
    # X cast to bf16 in-kernel: a free VPU pack hidden under the weight DMA.
    x = x_ref[...].astype(jnp.bfloat16)

    # int8 -> bf16 dequant of W1 (unit scale); the per-output-channel scale is
    # applied after the matmul on the tiny (B, HIDDEN) f32 accumulator.
    w1 = w1q_ref[...].astype(jnp.bfloat16)

    # backbone MLP hidden layer: Linear + ReLU -> Z            (B, HIDDEN) f32
    z = jnp.dot(x, w1, preferred_element_type=jnp.float32)
    z = jnp.maximum(z * s1_ref[...] + b1_ref[...], 0.0)

    # fused heads: classifier (cols 0:NUM_CLASSES) + folded discriminator
    # (col NUM_CLASSES); remaining HEAD_W-3 columns are zero.   (B, HEAD_W) f32
    out_ref[...] = (jnp.dot(z.astype(wh_ref.dtype), wh_ref[...],
                            preferred_element_type=jnp.float32) + bh_ref[...])


# ------------------------------- wrapper -------------------------------------
def _full_spec(shape):
    # full-array block (legal even when last dim < 128, since it equals the
    # array extent); no grid -> index_map takes no args.
    return pl.BlockSpec(shape, lambda: (0,) * len(shape))


def fold_params(p):
    """One-time (host-side) prep:
      * fold the activation-free two-layer discriminator into a single affine
        map and pack it with the classifier head into one (HIDDEN, HEAD_W)
        bf16 head matrix (exact algebraically; forward/inference only),
      * quantize W1 to int8 with a per-output-channel f32 scale (halves the
        dominant per-call HBM weight stream)."""
    wd = p["wd1"] @ p["wd2"]                     # (HIDDEN, 1)
    bd = p["bd1"] @ p["wd2"] + p["bd2"]          # (1, 1)

    w_head = jnp.zeros((HIDDEN, HEAD_W), jnp.float32)
    w_head = w_head.at[:, :NUM_CLASSES].set(p["wfc"])
    w_head = w_head.at[:, NUM_CLASSES:NUM_CLASSES + 1].set(wd)

    b_head = jnp.zeros((1, HEAD_W), jnp.float32)
    b_head = b_head.at[:, :NUM_CLASSES].set(p["bfc"])
    b_head = b_head.at[:, NUM_CLASSES:NUM_CLASSES + 1].set(bd)

    # int8 per-output-channel symmetric quantization of W1
    amax = jnp.max(jnp.abs(p["w1"]), axis=0, keepdims=True)       # (1, HIDDEN)
    scale = jnp.where(amax > 0, amax / 127.0, 1.0).astype(jnp.float32)
    w1_q = jnp.clip(jnp.round(p["w1"] / scale), -127, 127).astype(jnp.int8)

    return {
        "w1_q": w1_q,                            # (IN_FEATURES, HIDDEN) int8
        "w1_scale": scale,                       # (1, HIDDEN) f32
        "b1": p["b1"],                           # biases stay f32 (f32 epilogue)
        "w_head": w_head.astype(jnp.bfloat16),   # (HIDDEN, HEAD_W) bf16
        "b_head": b_head,                        # (1, HEAD_W) f32
    }


@jax.jit
def laftr_forward(X, Y, folded):
    """Returns (Y_logits, A_logits) like LaftrNet_MLP.forward(X, Y) (laftr-dp).
    Y only plays the 'not None' role in this variant; its values are unused."""
    del Y
    args = (X,                                   # f32; cast to bf16 in-kernel
            folded["w1_q"], folded["w1_scale"], folded["b1"],
            folded["w_head"], folded["b_head"])

    flops = 2 * B * (IN_FEATURES * HIDDEN + HIDDEN * HEAD_W)
    bytes_accessed = (sum(a.size * a.dtype.itemsize for a in args)
                      + B * HEAD_W * 4)

    out = pl.pallas_call(
        laftr_kernel,
        out_shape=jax.ShapeDtypeStruct((B, HEAD_W), jnp.float32),
        in_specs=[_full_spec(a.shape) for a in args],
        out_specs=_full_spec((B, HEAD_W)),
        compiler_params=pltpu.CompilerParams(),
        cost_estimate=pl.CostEstimate(flops=flops, transcendentals=0,
                                      bytes_accessed=bytes_accessed),
    )(*args)

    y_logits = out[:, :NUM_CLASSES]
    a_logits = jnp.squeeze(out[:, NUM_CLASSES:NUM_CLASSES + 1], axis=-1)  # (B,)
    return y_logits, a_logits


def make_params(key):
    ks = jax.random.split(key, 8)
    s = 0.1
    return {
        # backbone: Linear(in_features, hidden) (+ ReLU), Linear(hidden, n_classes)
        "w1":  s * jax.random.normal(ks[0], (IN_FEATURES, HIDDEN), jnp.float32),
        "b1":  s * jax.random.normal(ks[1], (1, HIDDEN), jnp.float32),
        "wfc": s * jax.random.normal(ks[2], (HIDDEN, NUM_CLASSES), jnp.float32),
        "bfc": s * jax.random.normal(ks[3], (1, NUM_CLASSES), jnp.float32),
        # discriminator: Linear(HIDDEN, ADV_SIZE), Linear(ADV_SIZE, used_classes-1)
        "wd1": s * jax.random.normal(ks[4], (HIDDEN, ADV_SIZE), jnp.float32),
        "bd1": s * jax.random.normal(ks[5], (1, ADV_SIZE), jnp.float32),
        "wd2": s * jax.random.normal(ks[6], (ADV_SIZE, USED_CLASSES - 1), jnp.float32),
        "bd2": s * jax.random.normal(ks[7], (1, USED_CLASSES - 1), jnp.float32),
    }


# ------------------------------ references -----------------------------------
def _reference_mirrored(X, f):
    """Plain-JAX replica of the exact kernel math (same int8/bf16 path)."""
    x = X.astype(jnp.bfloat16)
    w1 = f["w1_q"].astype(jnp.bfloat16)
    z = jnp.dot(x, w1, preferred_element_type=jnp.float32) * f["w1_scale"] + f["b1"]
    z = jnp.maximum(z, 0.0)
    out = jnp.dot(z.astype(jnp.bfloat16), f["w_head"],
                  preferred_element_type=jnp.float32) + f["b_head"]
    return out[:, :NUM_CLASSES], jnp.squeeze(out[:, NUM_CLASSES:NUM_CLASSES + 1],
                                             axis=-1)


def _reference_f32(X, p):
    """Exact f32, un-folded, un-quantized forward — the PyTorch-module semantics."""
    z = jnp.maximum(X @ p["w1"] + p["b1"], 0.0)
    y = z @ p["wfc"] + p["bfc"]
    a = (z @ p["wd1"] + p["bd1"]) @ p["wd2"] + p["bd2"]
    return y, jnp.squeeze(a, axis=-1)


if __name__ == "__main__":
    key = jax.random.PRNGKey(0)
    kx, ky, kp = jax.random.split(key, 3)

    X = jax.random.normal(kx, (B, IN_FEATURES), jnp.float32)
    # Y is only used as a "not None" flag for the laftr-dp variant
    Y = jax.random.randint(ky, (B, USED_CLASSES), 0, 2).astype(jnp.float32)

    params = make_params(kp)
    folded = fold_params(params)          # one-time host-side prep

    y_logits, a_logits = laftr_forward(X, Y, folded)
    jax.block_until_ready((y_logits, a_logits))

    assert y_logits.shape == (B, NUM_CLASSES)
    assert a_logits.shape == (B,)

    # tight check: kernel vs identical-math plain-JAX pipeline
    y_m, a_m = _reference_mirrored(X, folded)
    assert jnp.allclose(y_logits, y_m, atol=2e-2, rtol=2e-2)
    assert jnp.allclose(a_logits, a_m, atol=2e-2, rtol=2e-2)

    # loose check: kernel vs exact-f32 un-folded PyTorch-style reference
    # (tolerance sized for bf16-activation + int8-per-channel-weight
    #  quantization noise at K=1024)
    y_f, a_f = _reference_f32(X, params)
    assert jnp.allclose(y_logits, y_f, atol=0.7, rtol=0.05)
    assert jnp.allclose(a_logits, a_f, atol=0.7, rtol=0.05)

    print("KERNEL_OK")
</pallas_src>

<mosaic_0001>
module attributes {stable_mosaic.version = 11 : i64} {
  func.func @laftr_kernel(%arg0: memref<2x1024xf32, #tpu.memory_space<vmem>>, %arg1: memref<1024x1024xi8, #tpu.memory_space<vmem>>, %arg2: memref<1x1024xf32, #tpu.memory_space<vmem>>, %arg3: memref<1x1024xf32, #tpu.memory_space<vmem>>, %arg4: memref<1024x8xbf16, #tpu.memory_space<vmem>>, %arg5: memref<1x8xf32, #tpu.memory_space<vmem>>, %arg6: memref<2x8xf32, #tpu.memory_space<vmem>>) attributes {dimension_semantics = [], scalar_prefetch = 0 : i64, scratch_operands = 0 : i64, tpu.core_type = #tpu.core_type<tc>} {
    %c0 = arith.constant 0 : index
    %c0_0 = arith.constant 0 : index
    %0 = vector.load %arg0[%c0, %c0_0] : memref<2x1024xf32, #tpu.memory_space<vmem>>, vector<2x1024xf32>
    %1 = arith.truncf %0 : vector<2x1024xf32> to vector<2x1024xbf16>
    %c0_1 = arith.constant 0 : index
    %c0_2 = arith.constant 0 : index
    %2 = vector.load %arg1[%c0_1, %c0_2] : memref<1024x1024xi8, #tpu.memory_space<vmem>>, vector<1024x1024xi8>
    %3 = arith.sitofp %2 : vector<1024x1024xi8> to vector<1024x1024xbf16>
    %cst = arith.constant dense<0.000000e+00> : vector<2x1024xf32>
    %4 = tpu.matmul %1, %3, %cst {dimension_numbers = #tpu.dot_dimension_numbers<[1], [0], [0], [1], [0, 0, 1, 1], [], []>} : vector<2x1024xbf16>, vector<1024x1024xbf16>, vector<2x1024xf32> -> vector<2x1024xf32>
    %c0_3 = arith.constant 0 : index
    %c0_4 = arith.constant 0 : index
    %5 = vector.load %arg2[%c0_3, %c0_4] : memref<1x1024xf32, #tpu.memory_space<vmem>>, vector<1x1024xf32>
    %6 = vector.broadcast %5 : vector<1x1024xf32> to vector<2x1024xf32>
    %7 = arith.mulf %4, %6 : vector<2x1024xf32>
    %c0_5 = arith.constant 0 : index
    %c0_6 = arith.constant 0 : index
    %8 = vector.load %arg3[%c0_5, %c0_6] : memref<1x1024xf32, #tpu.memory_space<vmem>>, vector<1x1024xf32>
    %9 = vector.broadcast %8 : vector<1x1024xf32> to vector<2x1024xf32>
    %10 = arith.addf %7, %9 : vector<2x1024xf32>
    %cst_7 = arith.constant 0.000000e+00 : f32
    %11 = vector.broadcast %cst_7 : f32 to vector<2x1024xf32>
    %12 = arith.maximumf %10, %11 : vector<2x1024xf32>
    %13 = arith.truncf %12 : vector<2x1024xf32> to vector<2x1024xbf16>
    %c0_8 = arith.constant 0 : index
    %c0_9 = arith.constant 0 : index
    %14 = vector.load %arg4[%c0_8, %c0_9] : memref<1024x8xbf16, #tpu.memory_space<vmem>>, vector<1024x8xbf16>
    %cst_10 = arith.constant dense<0.000000e+00> : vector<2x8xf32>
    %15 = tpu.matmul %13, %14, %cst_10 {dimension_numbers = #tpu.dot_dimension_numbers<[1], [0], [0], [1], [0, 0, 1, 1], [], []>} : vector<2x1024xbf16>, vector<1024x8xbf16>, vector<2x8xf32> -> vector<2x8xf32>
    %c0_11 = arith.constant 0 : index
    %c0_12 = arith.constant 0 : index
    %16 = vector.load %arg5[%c0_11, %c0_12] : memref<1x8xf32, #tpu.memory_space<vmem>>, vector<1x8xf32>
    %17 = vector.broadcast %16 : vector<1x8xf32> to vector<2x8xf32>
    %18 = arith.addf %15, %17 : vector<2x8xf32>
    %c0_13 = arith.constant 0 : index
    %c0_14 = arith.constant 0 : index
    %19 = vector.load %arg6[%c0_13, %c0_14] : memref<2x8xf32, #tpu.memory_space<vmem>>, vector<2x8xf32>
    tpu.vector_store %arg6[%c0_13, %c0_14], %18 {strides = array<i32>} : memref<2x8xf32, #tpu.memory_space<vmem>>, vector<2x8xf32>,
    return
  }
}

</mosaic_0001>

<llo_original>
// kernel: laftr_forward.1
$region0: #{laftr_forward.1}
  #allocation0 [shape = 'u32[]', space=smem, size = 0x4, offset = 0x4, fixed_abs, tag = 'smem constant byte address 0x4 - core index']
  #allocation1 [shape = 'u32[144,128]{1,0:T(1,128)}', space=vmem, size = 0x12000, scoped, tag = 'internal scratch']
  %s0 = inlined_call_operand.vmem [shape: f32[2,1024], index: 0, kind: input, shape index: {}]
  %s1 = inlined_call_operand.hbm [shape: s8[1024,1024], index: 1, kind: input, shape index: {}]
  %s2 = inlined_call_operand.vmem [shape: f32[1,1024], index: 2, kind: input, shape index: {}]
  %s3 = inlined_call_operand.vmem [shape: f32[1,1024], index: 3, kind: input, shape index: {}]
  %s4 = inlined_call_operand.vmem [shape: bf16[1024,8], index: 4, kind: input, shape index: {}]
  %s5 = inlined_call_operand.vmem [shape: f32[1,8], index: 5, kind: input, shape index: {}]
  %s6 = inlined_call_operand.vmem [shape: f32[2,8], index: 6, kind: output, shape index: {}]
  %s7 = sld [smem:[#allocation0]]
  $region38: #{laftr_forward.1} parent=0
    _
  %s9 = ssub.s32 1, %s7
  %s10 = scalar_select 0, %s9, %s7
  $region1: #{laftr_forward.1} parent=0
    #allocation2 [shape = 'u8[1048576]{0}', space=vmem, size = 0x100000, scoped, tag = 'input window, operand 1, single buffered']
    #allocation3 [shape = 's32[1]{0}', space=sflag, size = 0x4, scoped, tag = 'scoped memory for laftr_forward.1']
    %11 = vsyncpa [#allocation3], 0
    // Predicated region
    $region2: #{laftr_forward.1} parent=1 // pred_check
      _
    $region3: #{laftr_forward.1} parent=1 // pred_check_branch
      %13 = sbr.rel (0) target = $region5
    $region4: #{laftr_forward.1} parent=1 // pred_region
      _
    $region5: #{laftr_forward.1} parent=1 // pred_fallthru
      _
    // Predicated region
    $region6: #{laftr_forward.1} parent=1 // pred_check
      _
    $region7: #{laftr_forward.1} parent=1 // pred_check_branch
      %15 = sbr.rel (0) target = $region9
    $region8: #{laftr_forward.1} parent=1 // pred_region
      %s17 = ssub.s32 32768, 32768
      %18 = vsyncadd [#allocation3], %s17
      %s19 = sshll.u32 [#allocation2], 4
      %s20 = int_to_ptr.vmem [resolvable:$true] %s19
      %25 = dma.hbm_to_vmem [thread:$0]  %s1, 32768, %s20, [#allocation3], 1024, 1024, 64
    $region9: #{laftr_forward.1} parent=1 // pred_fallthru
      _
    // Predicated region
    $region10: #{laftr_forward.1} parent=1 // pred_check
      _
    $region11: #{laftr_forward.1} parent=1 // pred_check_branch
      %27 = sbr.rel (0) target = $region13
    $region12: #{laftr_forward.1} parent=1 // pred_region
      _
    $region13: #{laftr_forward.1} parent=1 // pred_fallthru
      _
    // Predicated region
    $region14: #{laftr_forward.1} parent=1 // pred_check
      _
    $region15: #{laftr_forward.1} parent=1 // pred_check_branch
      %29 = sbr.rel (0) target = $region17
    $region16: #{laftr_forward.1} parent=1 // pred_region
      _
    $region17: #{laftr_forward.1} parent=1 // pred_fallthru
      _
    // Predicated region
    $region18: #{laftr_forward.1} parent=1 // pred_check
      _
    $region19: #{laftr_forward.1} parent=1 // pred_check_branch
      %31 = sbr.rel (0) target = $region21
    $region20: #{laftr_forward.1} parent=1 // pred_region
      _
    $region21: #{laftr_forward.1} parent=1 // pred_fallthru
      _
    // Predicated region
    $region22: #{laftr_forward.1} parent=1 // pred_check
      _
    $region23: #{laftr_forward.1} parent=1 // pred_check_branch
      %33 = sbr.rel (0) target = $region25
    $region24: #{laftr_forward.1} parent=1 // pred_region
      _
    $region25: #{laftr_forward.1} parent=1 // pred_fallthru
      _
    // Predicated region
    $region26: #{laftr_forward.1} parent=1 // pred_check
      _
    $region27: #{laftr_forward.1} parent=1 // pred_check_branch
      %35 = sbr.rel (0) target = $region29
    $region28: #{laftr_forward.1} parent=1 // pred_region
      %36 = dma.done [#allocation3], 32768
    $region29: #{laftr_forward.1} parent=1 // pred_fallthru
      _
    %v38 = vld [vmem:[%s0] sm:$0xff]
    %v39 = vld [vmem:[%s0 + $0x8] sm:$0xff]
    %v42 = vcombine.high %v38, %v38
    %v44 = vunpack.c.l.s4 1983009808
    %v45 = vunpack.c.0.s8 %v44
    %v46 = vlaneseq
    %v47 = vshrl.u32 %v46, 7
    %v48 = vsub.s32 %v45, %v47
    %v49 = vrot.slane %v38, %v48
    %v51 = vunpack.c.l.s4 1983009808
    %v52 = vunpack.c.0.s8 %v51
    %v53 = vlaneseq
    %v54 = vshrl.u32 %v53, 7
    %v55 = vsub.s32 %v52, %v54
    %v56 = vrot.slane %v42, %v55
    %v57 = vcombine.high %v49, %v49
    %v58 = vcombine.high %v56, %v56
    %v59 = vcombine.high %v39, %v39
    %v61 = vunpack.c.l.s4 1983009808
    %v62 = vunpack.c.0.s8 %v61
    %v63 = vlaneseq
    %v64 = vshrl.u32 %v63, 7
    %v65 = vsub.s32 %v62, %v64
    %v66 = vrot.slane %v39, %v65
    %v68 = vunpack.c.l.s4 1983009808
    %v69 = vunpack.c.0.s8 %v68
    %v70 = vlaneseq
    %v71 = vshrl.u32 %v70, 7
    %v72 = vsub.s32 %v69, %v71
    %v73 = vrot.slane %v59, %v72
    %v74 = vcombine.high %v66, %v66
    %v75 = vcombine.high %v73, %v73
    %v84 = vpack.c.bf16 %v49, %v49
    %v85 = vpack.c.bf16 %v57, %v57
    %v86 = vpack.c.bf16 %v56, %v56
    %v87 = vpack.c.bf16 %v58, %v58
    %v88 = vpack.c.bf16 %v66, %v66
    %v89 = vpack.c.bf16 %v74, %v74
    %v90 = vpack.c.bf16 %v73, %v73
    %v91 = vpack.c.bf16 %v75, %v75
    %v92 = vld [vmem:[#allocation2] sm:$0xff]
    %v93 = vld [vmem:[#allocation2 + $0x8] sm:$0xff]
    %v94 = vld [vmem:[#allocation2 + $0x10] sm:$0xff]
    %v95 = vld [vmem:[#allocation2 + $0x18] sm:$0xff]
    %v96 = vld [vmem:[#allocation2 + $0x20] sm:$0xff]
    %v97 = vld [vmem:[#allocation2 + $0x28] sm:$0xff]
    %v98 = vld [vmem:[#allocation2 + $0x30] sm:$0xff]
    %v99 = vld [vmem:[#allocation2 + $0x38] sm:$0xff]
    %v100 = vld [vmem:[#allocation2 + $0x40] sm:$0xff]
    %v101 = vld [vmem:[#allocation2 + $0x48] sm:$0xff]
    %v102 = vld [vmem:[#allocation2 + $0x50] sm:$0xff]
    %v103 = vld [vmem:[#allocation2 + $0x58] sm:$0xff]
    %v104 = vld [vmem:[#allocation2 + $0x60] sm:$0xff]
    %v105 = vld [vmem:[#allocation2 + $0x68] sm:$0xff]
    %v106 = vld [vmem:[#allocation2 + $0x70] sm:$0xff]
    %v107 = vld [vmem:[#allocation2 + $0x78] sm:$0xff]
    %v108 = vld [vmem:[#allocation2 + $0x80] sm:$0xff]
    %v109 = vld [vmem:[#allocation2 + $0x88] sm:$0xff]
    %v110 = vld [vmem:[#allocation2 + $0x90] sm:$0xff]
    %v111 = vld [vmem:[#allocation2 + $0x98] sm:$0xff]
    %v112 = vld [vmem:[#allocation2 + $0xa0] sm:$0xff]
    %v113 = vld [vmem:[#allocation2 + $0xa8] sm:$0xff]
    %v114 = vld [vmem:[#allocation2 + $0xb0] sm:$0xff]
    %v115 = vld [vmem:[#allocation2 + $0xb8] sm:$0xff]
    %v116 = vld [vmem:[#allocation2 + $0xc0] sm:$0xff]
    %v117 = vld [vmem:[#allocation2 + $0xc8] sm:$0xff]
    %v118 = vld [vmem:[#allocation2 + $0xd0] sm:$0xff]
    %v119 = vld [vmem:[#allocation2 + $0xd8] sm:$0xff]
    %v120 = vld [vmem:[#allocation2 + $0xe0] sm:$0xff]
    %v121 = vld [vmem:[#allocation2 + $0xe8] sm:$0xff]
    %v122 = vld [vmem:[#allocation2 + $0xf0] sm:$0xff]
    %v123 = vld [vmem:[#allocation2 + $0xf8] sm:$0xff]
    %v124 = vld [vmem:[#allocation2 + $0x100] sm:$0xff]
    %v125 = vld [vmem:[#allocation2 + $0x108] sm:$0xff]
    %v126 = vld [vmem:[#allocation2 + $0x110] sm:$0xff]
    %v127 = vld [vmem:[#allocation2 + $0x118] sm:$0xff]
    %v128 = vld [vmem:[#allocation2 + $0x120] sm:$0xff]
    %v129 = vld [vmem:[#allocation2 + $0x128] sm:$0xff]
    %v130 = vld [vmem:[#allocation2 + $0x130] sm:$0xff]
    %v131 = vld [vmem:[#allocation2 + $0x138] sm:$0xff]
    %v132 = vld [vmem:[#allocation2 + $0x140] sm:$0xff]
    %v133 = vld [vmem:[#allocation2 + $0x148] sm:$0xff]
    %v134 = vld [vmem:[#allocation2 + $0x150] sm:$0xff]
    %v135 = vld [vmem:[#allocation2 + $0x158] sm:$0xff]
    %v136 = vld [vmem:[#allocation2 + $0x160] sm:$0xff]
    %v137 = vld [vmem:[#allocation2 + $0x168] sm:$0xff]
    %v138 = vld [vmem:[#allocation2 + $0x170] sm:$0xff]
    %v139 = vld [vmem:[#allocation2 + $0x178] sm:$0xff]
    %v140 = vld [vmem:[#allocation2 + $0x180] sm:$0xff]
    %v141 = vld [vmem:[#allocation2 + $0x188] sm:$0xff]
    %v142 = vld [vmem:[#allocation2 + $0x190] sm:$0xff]
    %v143 = vld [vmem:[#allocation2 + $0x198] sm:$0xff]
    %v144 = vld [vmem:[#allocation2 + $0x1a0] sm:$0xff]
    %v145 = vld [vmem:[#allocation2 + $0x1a8] sm:$0xff]
    %v146 = vld [vmem:[#allocation2 + $0x1b0] sm:$0xff]
    %v147 = vld [vmem:[#allocation2 + $0x1b8] sm:$0xff]
    %v148 = vld [vmem:[#allocation2 + $0x1c0] sm:$0xff]
    %v149 = vld [vmem:[#allocation2 + $0x1c8] sm:$0xff]
    %v150 = vld [vmem:[#allocation2 + $0x1d0] sm:$0xff]
    %v151 = vld [vmem:[#allocation2 + $0x1d8] sm:$0xff]
    %v152 = vld [vmem:[#allocation2 + $0x1e0] sm:$0xff]
    %v153 = vld [vmem:[#allocation2 + $0x1e8] sm:$0xff]
    %v154 = vld [vmem:[#allocation2 + $0x1f0] sm:$0xff]
    %v155 = vld [vmem:[#allocation2 + $0x1f8] sm:$0xff]
    %v156 = vld [vmem:[#allocation2 + $0x200] sm:$0xff]
    %v157 = vld [vmem:[#allocation2 + $0x208] sm:$0xff]
    %v158 = vld [vmem:[#allocation2 + $0x210] sm:$0xff]
    %v159 = vld [vmem:[#allocation2 + $0x218] sm:$0xff]
    %v160 = vld [vmem:[#allocation2 + $0x220] sm:$0xff]
    %v161 = vld [vmem:[#allocation2 + $0x228] sm:$0xff]
    %v162 = vld [vmem:[#allocation2 + $0x230] sm:$0xff]
    %v163 = vld [vmem:[#allocation2 + $0x238] sm:$0xff]
    %v164 = vld [vmem:[#allocation2 + $0x240] sm:$0xff]
    %v165 = vld [vmem:[#allocation2 + $0x248] sm:$0xff]
    %v166 = vld [vmem:[#allocation2 + $0x250] sm:$0xff]
    %v167 = vld [vmem:[#allocation2 + $0x258] sm:$0xff]
    %v168 = vld [vmem:[#allocation2 + $0x260] sm:$0xff]
    %v169 = vld [vmem:[#allocation2 + $0x268] sm:$0xff]
    %v170 = vld [vmem:[#allocation2 + $0x270] sm:$0xff]
    %v171 = vld [vmem:[#allocation2 + $0x278] sm:$0xff]
    %v172 = vld [vmem:[#allocation2 + $0x280] sm:$0xff]
    %v173 = vld [vmem:[#allocation2 + $0x288] sm:$0xff]
    %v174 = vld [vmem:[#allocation2 + $0x290] sm:$0xff]
    %v175 = vld [vmem:[#allocation2 + $0x298] sm:$0xff]
    %v176 = vld [vmem:[#allocation2 + $0x2a0] sm:$0xff]
    %v177 = vld [vmem:[#allocation2 + $0x2a8] sm:$0xff]
    %v178 = vld [vmem:[#allocation2 + $0x2b0] sm:$0xff]
    %v179 = vld [vmem:[#allocation2 + $0x2b8] sm:$0xff]
    %v180 = vld [vmem:[#allocation2 + $0x2c0] sm:$0xff]
    %v181 = vld [vmem:[#allocation2 + $0x2c8] sm:$0xff]
    %v182 = vld [vmem:[#allocation2 + $0x2d0] sm:$0xff]
    %v183 = vld [vmem:[#allocation2 + $0x2d8] sm:$0xff]
    %v184 = vld [vmem:[#allocation2 + $0x2e0] sm:$0xff]
    %v185 = vld [vmem:[#allocation2 + $0x2e8] sm:$0xff]
    %v186 = vld [vmem:[#allocation2 + $0x2f0] sm:$0xff]
    %v187 = vld [vmem:[#allocation2 + $0x2f8] sm:$0xff]
    %v188 = vld [vmem:[#allocation2 + $0x300] sm:$0xff]
    %v189 = vld [vmem:[#allocation2 + $0x308] sm:$0xff]
    %v190 = vld [vmem:[#allocation2 + $0x310] sm:$0xff]
    %v191 = vld [vmem:[#allocation2 + $0x318] sm:$0xff]
    %v192 = vld [vmem:[#allocation2 + $0x320] sm:$0xff]
    %v193 = vld [vmem:[#allocation2 + $0x328] sm:$0xff]
    %v194 = vld [vmem:[#allocation2 + $0x330] sm:$0xff]
    %v195 = vld [vmem:[#allocation2 + $0x338] sm:$0xff]
    %v196 = vld [vmem:[#allocation2 + $0x340] sm:$0xff]
    %v197 = vld [vmem:[#allocation2 + $0x348] sm:$0xff]
    %v198 = vld [vmem:[#allocation2 + $0x350] sm:$0xff]
    %v199 = vld [vmem:[#allocation2 + $0x358] sm:$0xff]
    %v200 = vld [vmem:[#allocation2 + $0x360] sm:$0xff]
    %v201 = vld [vmem:[#allocation2 + $0x368] sm:$0xff]
    %v202 = vld [vmem:[#allocation2 + $0x370] sm:$0xff]
    %v203 = vld [vmem:[#allocation2 + $0x378] sm:$0xff]
    %v204 = vld [vmem:[#allocation2 + $0x380] sm:$0xff]
    %v205 = vld [vmem:[#allocation2 + $0x388] sm:$0xff]
    %v206 = vld [vmem:[#allocation2 + $0x390] sm:$0xff]
    %v207 = vld [vmem:[#allocation2 + $0x398] sm:$0xff]
    %v208 = vld [vmem:[#allocation2 + $0x3a0] sm:$0xff]
    %v209 = vld [vmem:[#allocation2 + $0x3a8] sm:$0xff]
    %v210 = vld [vmem:[#allocation2 + $0x3b0] sm:$0xff]
    %v211 = vld [vmem:[#allocation2 + $0x3b8] sm:$0xff]
    %v212 = vld [vmem:[#allocation2 + $0x3c0] sm:$0xff]
    %v213 = vld [vmem:[#allocation2 + $0x3c8] sm:$0xff]
    %v214 = vld [vmem:[#allocation2 + $0x3d0] sm:$0xff]
    %v215 = vld [vmem:[#allocation2 + $0x3d8] sm:$0xff]
    %v216 = vld [vmem:[#allocation2 + $0x3e0] sm:$0xff]
    %v217 = vld [vmem:[#allocation2 + $0x3e8] sm:$0xff]
    %v218 = vld [vmem:[#allocation2 + $0x3f0] sm:$0xff]
    %v219 = vld [vmem:[#allocation2 + $0x3f8] sm:$0xff]
    %v220 = vld [vmem:[#allocation2 + $0x400] sm:$0xff]
    %v221 = vld [vmem:[#allocation2 + $0x408] sm:$0xff]
    %v222 = vld [vmem:[#allocation2 + $0x410] sm:$0xff]
    %v223 = vld [vmem:[#allocation2 + $0x418] sm:$0xff]
    %v224 = vld [vmem:[#allocation2 + $0x420] sm:$0xff]
    %v225 = vld [vmem:[#allocation2 + $0x428] sm:$0xff]
    %v226 = vld [vmem:[#allocation2 + $0x430] sm:$0xff]
    %v227 = vld [vmem:[#allocation2 + $0x438] sm:$0xff]
    %v228 = vld [vmem:[#allocation2 + $0x440] sm:$0xff]
    %v229 = vld [vmem:[#allocation2 + $0x448] sm:$0xff]
    %v230 = vld [vmem:[#allocation2 + $0x450] sm:$0xff]
    %v231 = vld [vmem:[#allocation2 + $0x458] sm:$0xff]
    %v232 = vld [vmem:[#allocation2 + $0x460] sm:$0xff]
    %v233 = vld [vmem:[#allocation2 + $0x468] sm:$0xff]
    %v234 = vld [vmem:[#allocation2 + $0x470] sm:$0xff]
    %v235 = vld [vmem:[#allocation2 + $0x478] sm:$0xff]
    %v236 = vld [vmem:[#allocation2 + $0x480] sm:$0xff]
    %v237 = vld [vmem:[#allocation2 + $0x488] sm:$0xff]
    %v238 = vld [vmem:[#allocation2 + $0x490] sm:$0xff]
    %v239 = vld [vmem:[#allocation2 + $0x498] sm:$0xff]
    %v240 = vld [vmem:[#allocation2 + $0x4a0] sm:$0xff]
    %v241 = vld [vmem:[#allocation2 + $0x4a8] sm:$0xff]
    %v242 = vld [vmem:[#allocation2 + $0x4b0] sm:$0xff]
    %v243 = vld [vmem:[#allocation2 + $0x4b8] sm:$0xff]
    %v244 = vld [vmem:[#allocation2 + $0x4c0] sm:$0xff]
    %v245 = vld [vmem:[#allocation2 + $0x4c8] sm:$0xff]
    %v246 = vld [vmem:[#allocation2 + $0x4d0] sm:$0xff]
    %v247 = vld [vmem:[#allocation2 + $0x4d8] sm:$0xff]
    %v248 = vld [vmem:[#allocation2 + $0x4e0] sm:$0xff]
    %v249 = vld [vmem:[#allocation2 + $0x4e8] sm:$0xff]
    %v250 = vld [vmem:[#allocation2 + $0x4f0] sm:$0xff]
    %v251 = vld [vmem:[#allocation2 + $0x4f8] sm:$0xff]
    %v252 = vld [vmem:[#allocation2 + $0x500] sm:$0xff]
    %v253 = vld [vmem:[#allocation2 + $0x508] sm:$0xff]
    %v254 = vld [vmem:[#allocation2 + $0x510] sm:$0xff]
    %v255 = vld [vmem:[#allocation2 + $0x518] sm:$0xff]
    %v256 = vld [vmem:[#allocation2 + $0x520] sm:$0xff]
    %v257 = vld [vmem:[#allocation2 + $0x528] sm:$0xff]
    %v258 = vld [vmem:[#allocation2 + $0x530] sm:$0xff]
    %v259 = vld [vmem:[#allocation2 + $0x538] sm:$0xff]
    %v260 = vld [vmem:[#allocation2 + $0x540] sm:$0xff]
    %v261 = vld [vmem:[#allocation2 + $0x548] sm:$0xff]
    %v262 = vld [vmem:[#allocation2 + $0x550] sm:$0xff]
    %v263 = vld [vmem:[#allocation2 + $0x558] sm:$0xff]
    %v264 = vld [vmem:[#allocation2 + $0x560] sm:$0xff]
    %v265 = vld [vmem:[#allocation2 + $0x568] sm:$0xff]
    %v266 = vld [vmem:[#allocation2 + $0x570] sm:$0xff]
    %v267 = vld [vmem:[#allocation2 + $0x578] sm:$0xff]
    %v268 = vld [vmem:[#allocation2 + $0x580] sm:$0xff]
    %v269 = vld [vmem:[#allocation2 + $0x588] sm:$0xff]
    %v270 = vld [vmem:[#allocation2 + $0x590] sm:$0xff]
    %v271 = vld [vmem:[#allocation2 + $0x598] sm:$0xff]
    %v272 = vld [vmem:[#allocation2 + $0x5a0] sm:$0xff]
    %v273 = vld [vmem:[#allocation2 + $0x5a8] sm:$0xff]
    %v274 = vld [vmem:[#allocation2 + $0x5b0] sm:$0xff]
    %v275 = vld [vmem:[#allocation2 + $0x5b8] sm:$0xff]
    %v276 = vld [vmem:[#allocation2 + $0x5c0] sm:$0xff]
    %v277 = vld [vmem:[#allocation2 + $0x5c8] sm:$0xff]
    %v278 = vld [vmem:[#allocation2 + $0x5d0] sm:$0xff]
    %v279 = vld [vmem:[#allocation2 + $0x5d8] sm:$0xff]
    %v280 = vld [vmem:[#allocation2 + $0x5e0] sm:$0xff]
    %v281 = vld [vmem:[#allocation2 + $0x5e8] sm:$0xff]
    %v282 = vld [vmem:[#allocation2 + $0x5f0] sm:$0xff]
    %v283 = vld [vmem:[#allocation2 + $0x5f8] sm:$0xff]
    %v284 = vld [vmem:[#allocation2 + $0x600] sm:$0xff]
    %v285 = vld [vmem:[#allocation2 + $0x608] sm:$0xff]
    %v286 = vld [vmem:[#allocation2 + $0x610] sm:$0xff]
    %v287 = vld [vmem:[#allocation2 + $0x618] sm:$0xff]
    %v288 = vld [vmem:[#allocation2 + $0x620] sm:$0xff]
    %v289 = vld [vmem:[#allocation2 + $0x628] sm:$0xff]
    %v290 = vld [vmem:[#allocation2 + $0x630] sm:$0xff]
    %v291 = vld [vmem:[#allocation2 + $0x638] sm:$0xff]
    %v292 = vld [vmem:[#allocation2 + $0x640] sm:$0xff]
    %v293 = vld [vmem:[#allocation2 + $0x648] sm:$0xff]
    %v294 = vld [vmem:[#allocation2 + $0x650] sm:$0xff]
    %v295 = vld [vmem:[#allocation2 + $0x658] sm:$0xff]
    %v296 = vld [vmem:[#allocation2 + $0x660] sm:$0xff]
    %v297 = vld [vmem:[#allocation2 + $0x668] sm:$0xff]
    %v298 = vld [vmem:[#allocation2 + $0x670] sm:$0xff]
    %v299 = vld [vmem:[#allocation2 + $0x678] sm:$0xff]
    %v300 = vld [vmem:[#allocation2 + $0x680] sm:$0xff]
    %v301 = vld [vmem:[#allocation2 + $0x688] sm:$0xff]
    %v302 = vld [vmem:[#allocation2 + $0x690] sm:$0xff]
    %v303 = vld [vmem:[#allocation2 + $0x698] sm:$0xff]
    %v304 = vld [vmem:[#allocation2 + $0x6a0] sm:$0xff]
    %v305 = vld [vmem:[#allocation2 + $0x6a8] sm:$0xff]
    %v306 = vld [vmem:[#allocation2 + $0x6b0] sm:$0xff]
    %v307 = vld [vmem:[#allocation2 + $0x6b8] sm:$0xff]
    %v308 = vld [vmem:[#allocation2 + $0x6c0] sm:$0xff]
    %v309 = vld [vmem:[#allocation2 + $0x6c8] sm:$0xff]
    %v310 = vld [vmem:[#allocation2 + $0x6d0] sm:$0xff]
    %v311 = vld [vmem:[#allocation2 + $0x6d8] sm:$0xff]
    %v312 = vld [vmem:[#allocation2 + $0x6e0] sm:$0xff]
    %v313 = vld [vmem:[#allocation2 + $0x6e8] sm:$0xff]
    %v314 = vld [vmem:[#allocation2 + $0x6f0] sm:$0xff]
    %v315 = vld [vmem:[#allocation2 + $0x6f8] sm:$0xff]
    %v316 = vld [vmem:[#allocation2 + $0x700] sm:$0xff]
    %v317 = vld [vmem:[#allocation2 + $0x708] sm:$0xff]
    %v318 = vld [vmem:[#allocation2 + $0x710] sm:$0xff]
    %v319 = vld [vmem:[#allocation2 + $0x718] sm:$0xff]
    %v320 = vld [vmem:[#allocation2 + $0x720] sm:$0xff]
    %v321 = vld [vmem:[#allocation2 + $0x728] sm:$0xff]
    %v322 = vld [vmem:[#allocation2 + $0x730] sm:$0xff]
    %v323 = vld [vmem:[#allocation2 + $0x738] sm:$0xff]
    %v324 = vld [vmem:[#allocation2 + $0x740] sm:$0xff]
    %v325 = vld [vmem:[#allocation2 + $0x748] sm:$0xff]
    %v326 = vld [vmem:[#allocation2 + $0x750] sm:$0xff]
    %v327 = vld [vmem:[#allocation2 + $0x758] sm:$0xff]
    %v328 = vld [vmem:[#allocation2 + $0x760] sm:$0xff]
    %v329 = vld [vmem:[#allocation2 + $0x768] sm:$0xff]
    %v330 = vld [vmem:[#allocation2 + $0x770] sm:$0xff]
    %v331 = vld [vmem:[#allocation2 + $0x778] sm:$0xff]
    %v332 = vld [vmem:[#allocation2 + $0x780] sm:$0xff]
    %v333 = vld [vmem:[#allocation2 + $0x788] sm:$0xff]
    %v334 = vld [vmem:[#allocation2 + $0x790] sm:$0xff]
    %v335 = vld [vmem:[#allocation2 + $0x798] sm:$0xff]
    %v336 = vld [vmem:[#allocation2 + $0x7a0] sm:$0xff]
    %v337 = vld [vmem:[#allocation2 + $0x7a8] sm:$0xff]
    %v338 = vld [vmem:[#allocation2 + $0x7b0] sm:$0xff]
    %v339 = vld [vmem:[#allocation2 + $0x7b8] sm:$0xff]
    %v340 = vld [vmem:[#allocation2 + $0x7c0] sm:$0xff]
    %v341 = vld [vmem:[#allocation2 + $0x7c8] sm:$0xff]
    %v342 = vld [vmem:[#allocation2 + $0x7d0] sm:$0xff]
    %v343 = vld [vmem:[#allocation2 + $0x7d8] sm:$0xff]
    %v344 = vld [vmem:[#allocation2 + $0x7e0] sm:$0xff]
    %v345 = vld [vmem:[#allocation2 + $0x7e8] sm:$0xff]
    %v346 = vld [vmem:[#allocation2 + $0x7f0] sm:$0xff]
    %v347 = vld [vmem:[#allocation2 + $0x7f8] sm:$0xff]
    %v348 = vunpack.c.l.s8.bf16 %v92
    %v349 = vunpack.c.l.s8.bf16 %v93
    %v350 = vunpack.c.l.s8.bf16 %v94
    %v351 = vunpack.c.l.s8.bf16 %v95
    %v352 = vunpack.c.l.s8.bf16 %v96
    %v353 = vunpack.c.l.s8.bf16 %v97
    %v354 = vunpack.c.l.s8.bf16 %v98
    %v355 = vunpack.c.l.s8.bf16 %v99
    %v356 = vunpack.c.h.s8.bf16 %v92
    %v357 = vunpack.c.h.s8.bf16 %v93
    %v358 = vunpack.c.h.s8.bf16 %v94
    %v359 = vunpack.c.h.s8.bf16 %v95
    %v360 = vunpack.c.h.s8.bf16 %v96
    %v361 = vunpack.c.h.s8.bf16 %v97
    %v362 = vunpack.c.h.s8.bf16 %v98
    %v363 = vunpack.c.h.s8.bf16 %v99
    %v364 = vunpack.c.l.s8.bf16 %v100
    %v365 = vunpack.c.l.s8.bf16 %v101
    %v366 = vunpack.c.l.s8.bf16 %v102
    %v367 = vunpack.c.l.s8.bf16 %v103
    %v368 = vunpack.c.l.s8.bf16 %v104
    %v369 = vunpack.c.l.s8.bf16 %v105
    %v370 = vunpack.c.l.s8.bf16 %v106
    %v371 = vunpack.c.l.s8.bf16 %v107
    %v372 = vunpack.c.h.s8.bf16 %v100
    %v373 = vunpack.c.h.s8.bf16 %v101
    %v374 = vunpack.c.h.s8.bf16 %v102
    %v375 = vunpack.c.h.s8.bf16 %v103
    %v376 = vunpack.c.h.s8.bf16 %v104
    %v377 = vunpack.c.h.s8.bf16 %v105
    %v378 = vunpack.c.h.s8.bf16 %v106
    %v379 = vunpack.c.h.s8.bf16 %v107
    %v380 = vunpack.c.l.s8.bf16 %v108
    %v381 = vunpack.c.l.s8.bf16 %v109
    %v382 = vunpack.c.l.s8.bf16 %v110
    %v383 = vunpack.c.l.s8.bf16 %v111
    %v384 = vunpack.c.l.s8.bf16 %v112
    %v385 = vunpack.c.l.s8.bf16 %v113
    %v386 = vunpack.c.l.s8.bf16 %v114
    %v387 = vunpack.c.l.s8.bf16 %v115
    %v388 = vunpack.c.h.s8.bf16 %v108
    %v389 = vunpack.c.h.s8.bf16 %v109
    %v390 = vunpack.c.h.s8.bf16 %v110
    %v391 = vunpack.c.h.s8.bf16 %v111
    %v392 = vunpack.c.h.s8.bf16 %v112
    %v393 = vunpack.c.h.s8.bf16 %v113
    %v394 = vunpack.c.h.s8.bf16 %v114
    %v395 = vunpack.c.h.s8.bf16 %v115
    %v396 = vunpack.c.l.s8.bf16 %v116
    %v397 = vunpack.c.l.s8.bf16 %v117
    %v398 = vunpack.c.l.s8.bf16 %v118
    %v399 = vunpack.c.l.s8.bf16 %v119
    %v400 = vunpack.c.l.s8.bf16 %v120
    %v401 = vunpack.c.l.s8.bf16 %v121
    %v402 = vunpack.c.l.s8.bf16 %v122
    %v403 = vunpack.c.l.s8.bf16 %v123
    %v404 = vunpack.c.h.s8.bf16 %v116
    %v405 = vunpack.c.h.s8.bf16 %v117
    %v406 = vunpack.c.h.s8.bf16 %v118
    %v407 = vunpack.c.h.s8.bf16 %v119
    %v408 = vunpack.c.h.s8.bf16 %v120
    %v409 = vunpack.c.h.s8.bf16 %v121
    %v410 = vunpack.c.h.s8.bf16 %v122
    %v411 = vunpack.c.h.s8.bf16 %v123
    %v412 = vunpack.c.l.s8.bf16 %v124
    %v413 = vunpack.c.l.s8.bf16 %v125
    %v414 = vunpack.c.l.s8.bf16 %v126
    %v415 = vunpack.c.l.s8.bf16 %v127
    %v416 = vunpack.c.l.s8.bf16 %v128
    %v417 = vunpack.c.l.s8.bf16 %v129
    %v418 = vunpack.c.l.s8.bf16 %v130
    %v419 = vunpack.c.l.s8.bf16 %v131
    %v420 = vunpack.c.h.s8.bf16 %v124
    %v421 = vunpack.c.h.s8.bf16 %v125
    %v422 = vunpack.c.h.s8.bf16 %v126
    %v423 = vunpack.c.h.s8.bf16 %v127
    %v424 = vunpack.c.h.s8.bf16 %v128
    %v425 = vunpack.c.h.s8.bf16 %v129
    %v426 = vunpack.c.h.s8.bf16 %v130
    %v427 = vunpack.c.h.s8.bf16 %v131
    %v428 = vunpack.c.l.s8.bf16 %v132
    %v429 = vunpack.c.l.s8.bf16 %v133
    %v430 = vunpack.c.l.s8.bf16 %v134
    %v431 = vunpack.c.l.s8.bf16 %v135
    %v432 = vunpack.c.l.s8.bf16 %v136
    %v433 = vunpack.c.l.s8.bf16 %v137
    %v434 = vunpack.c.l.s8.bf16 %v138
    %v435 = vunpack.c.l.s8.bf16 %v139
    %v436 = vunpack.c.h.s8.bf16 %v132
    %v437 = vunpack.c.h.s8.bf16 %v133
    %v438 = vunpack.c.h.s8.bf16 %v134
    %v439 = vunpack.c.h.s8.bf16 %v135
    %v440 = vunpack.c.h.s8.bf16 %v136
    %v441 = vunpack.c.h.s8.bf16 %v137
    %v442 = vunpack.c.h.s8.bf16 %v138
    %v443 = vunpack.c.h.s8.bf16 %v139
    %v444 = vunpack.c.l.s8.bf16 %v140
    %v445 = vunpack.c.l.s8.bf16 %v141
    %v446 = vunpack.c.l.s8.bf16 %v142
    %v447 = vunpack.c.l.s8.bf16 %v143
    %v448 = vunpack.c.l.s8.bf16 %v144
    %v449 = vunpack.c.l.s8.bf16 %v145
    %v450 = vunpack.c.l.s8.bf16 %v146
    %v451 = vunpack.c.l.s8.bf16 %v147
    %v452 = vunpack.c.h.s8.bf16 %v140
    %v453 = vunpack.c.h.s8.bf16 %v141
    %v454 = vunpack.c.h.s8.bf16 %v142
    %v455 = vunpack.c.h.s8.bf16 %v143
    %v456 = vunpack.c.h.s8.bf16 %v144
    %v457 = vunpack.c.h.s8.bf16 %v145
    %v458 = vunpack.c.h.s8.bf16 %v146
    %v459 = vunpack.c.h.s8.bf16 %v147
    %v460 = vunpack.c.l.s8.bf16 %v148
    %v461 = vunpack.c.l.s8.bf16 %v149
    %v462 = vunpack.c.l.s8.bf16 %v150
    %v463 = vunpack.c.l.s8.bf16 %v151
    %v464 = vunpack.c.l.s8.bf16 %v152
    %v465 = vunpack.c.l.s8.bf16 %v153
    %v466 = vunpack.c.l.s8.bf16 %v154
    %v467 = vunpack.c.l.s8.bf16 %v155
    %v468 = vunpack.c.h.s8.bf16 %v148
    %v469 = vunpack.c.h.s8.bf16 %v149
    %v470 = vunpack.c.h.s8.bf16 %v150
    %v471 = vunpack.c.h.s8.bf16 %v151
    %v472 = vunpack.c.h.s8.bf16 %v152
    %v473 = vunpack.c.h.s8.bf16 %v153
    %v474 = vunpack.c.h.s8.bf16 %v154
    %v475 = vunpack.c.h.s8.bf16 %v155
    %v476 = vunpack.c.l.s8.bf16 %v156
    %v477 = vunpack.c.l.s8.bf16 %v157
    %v478 = vunpack.c.l.s8.bf16 %v158
    %v479 = vunpack.c.l.s8.bf16 %v159
    %v480 = vunpack.c.l.s8.bf16 %v160
    %v481 = vunpack.c.l.s8.bf16 %v161
    %v482 = vunpack.c.l.s8.bf16 %v162
    %v483 = vunpack.c.l.s8.bf16 %v163
    %v484 = vunpack.c.h.s8.bf16 %v156
    %v485 = vunpack.c.h.s8.bf16 %v157
    %v486 = vunpack.c.h.s8.bf16 %v158
    %v487 = vunpack.c.h.s8.bf16 %v159
    %v488 = vunpack.c.h.s8.bf16 %v160
    %v489 = vunpack.c.h.s8.bf16 %v161
    %v490 = vunpack.c.h.s8.bf16 %v162
    %v491 = vunpack.c.h.s8.bf16 %v163
    %v492 = vunpack.c.l.s8.bf16 %v164
    %v493 = vunpack.c.l.s8.bf16 %v165
    %v494 = vunpack.c.l.s8.bf16 %v166
    %v495 = vunpack.c.l.s8.bf16 %v167
    %v496 = vunpack.c.l.s8.bf16 %v168
    %v497 = vunpack.c.l.s8.bf16 %v169
    %v498 = vunpack.c.l.s8.bf16 %v170
    %v499 = vunpack.c.l.s8.bf16 %v171
    %v500 = vunpack.c.h.s8.bf16 %v164
    %v501 = vunpack.c.h.s8.bf16 %v165
    %v502 = vunpack.c.h.s8.bf16 %v166
    %v503 = vunpack.c.h.s8.bf16 %v167
    %v504 = vunpack.c.h.s8.bf16 %v168
    %v505 = vunpack.c.h.s8.bf16 %v169
    %v506 = vunpack.c.h.s8.bf16 %v170
    %v507 = vunpack.c.h.s8.bf16 %v171
    %v508 = vunpack.c.l.s8.bf16 %v172
    %v509 = vunpack.c.l.s8.bf16 %v173
    %v510 = vunpack.c.l.s8.bf16 %v174
    %v511 = vunpack.c.l.s8.bf16 %v175
    %v512 = vunpack.c.l.s8.bf16 %v176
    %v513 = vunpack.c.l.s8.bf16 %v177
    %v514 = vunpack.c.l.s8.bf16 %v178
    %v515 = vunpack.c.l.s8.bf16 %v179
    %v516 = vunpack.c.h.s8.bf16 %v172
    %v517 = vunpack.c.h.s8.bf16 %v173
    %v518 = vunpack.c.h.s8.bf16 %v174
    %v519 = vunpack.c.h.s8.bf16 %v175
    %v520 = vunpack.c.h.s8.bf16 %v176
    %v521 = vunpack.c.h.s8.bf16 %v177
    %v522 = vunpack.c.h.s8.bf16 %v178
    %v523 = vunpack.c.h.s8.bf16 %v179
    %v524 = vunpack.c.l.s8.bf16 %v180
    %v525 = vunpack.c.l.s8.bf16 %v181
    %v526 = vunpack.c.l.s8.bf16 %v182
    %v527 = vunpack.c.l.s8.bf16 %v183
    %v528 = vunpack.c.l.s8.bf16 %v184
    %v529 = vunpack.c.l.s8.bf16 %v185
    %v530 = vunpack.c.l.s8.bf16 %v186
    %v531 = vunpack.c.l.s8.bf16 %v187
    %v532 = vunpack.c.h.s8.bf16 %v180
    %v533 = vunpack.c.h.s8.bf16 %v181
    %v534 = vunpack.c.h.s8.bf16 %v182
    %v535 = vunpack.c.h.s8.bf16 %v183
    %v536 = vunpack.c.h.s8.bf16 %v184
    %v537 = vunpack.c.h.s8.bf16 %v185
    %v538 = vunpack.c.h.s8.bf16 %v186
    %v539 = vunpack.c.h.s8.bf16 %v187
    %v540 = vunpack.c.l.s8.bf16 %v188
    %v541 = vunpack.c.l.s8.bf16 %v189
    %v542 = vunpack.c.l.s8.bf16 %v190
    %v543 = vunpack.c.l.s8.bf16 %v191
    %v544 = vunpack.c.l.s8.bf16 %v192
    %v545 = vunpack.c.l.s8.bf16 %v193
    %v546 = vunpack.c.l.s8.bf16 %v194
    %v547 = vunpack.c.l.s8.bf16 %v195
    %v548 = vunpack.c.h.s8.bf16 %v188
    %v549 = vunpack.c.h.s8.bf16 %v189
    %v550 = vunpack.c.h.s8.bf16 %v190
    %v551 = vunpack.c.h.s8.bf16 %v191
    %v552 = vunpack.c.h.s8.bf16 %v192
    %v553 = vunpack.c.h.s8.bf16 %v193
    %v554 = vunpack.c.h.s8.bf16 %v194
    %v555 = vunpack.c.h.s8.bf16 %v195
    %v556 = vunpack.c.l.s8.bf16 %v196
    %v557 = vunpack.c.l.s8.bf16 %v197
    %v558 = vunpack.c.l.s8.bf16 %v198
    %v559 = vunpack.c.l.s8.bf16 %v199
    %v560 = vunpack.c.l.s8.bf16 %v200
    %v561 = vunpack.c.l.s8.bf16 %v201
    %v562 = vunpack.c.l.s8.bf16 %v202
    %v563 = vunpack.c.l.s8.bf16 %v203
    %v564 = vunpack.c.h.s8.bf16 %v196
    %v565 = vunpack.c.h.s8.bf16 %v197
    %v566 = vunpack.c.h.s8.bf16 %v198
    %v567 = vunpack.c.h.s8.bf16 %v199
    %v568 = vunpack.c.h.s8.bf16 %v200
    %v569 = vunpack.c.h.s8.bf16 %v201
    %v570 = vunpack.c.h.s8.bf16 %v202
    %v571 = vunpack.c.h.s8.bf16 %v203
    %v572 = vunpack.c.l.s8.bf16 %v204
    %v573 = vunpack.c.l.s8.bf16 %v205
    %v574 = vunpack.c.l.s8.bf16 %v206
    %v575 = vunpack.c.l.s8.bf16 %v207
    %v576 = vunpack.c.l.s8.bf16 %v208
    %v577 = vunpack.c.l.s8.bf16 %v209
    %v578 = vunpack.c.l.s8.bf16 %v210
    %v579 = vunpack.c.l.s8.bf16 %v211
    %v580 = vunpack.c.h.s8.bf16 %v204
    %v581 = vunpack.c.h.s8.bf16 %v205
    %v582 = vunpack.c.h.s8.bf16 %v206
    %v583 = vunpack.c.h.s8.bf16 %v207
    %v584 = vunpack.c.h.s8.bf16 %v208
    %v585 = vunpack.c.h.s8.bf16 %v209
    %v586 = vunpack.c.h.s8.bf16 %v210
    %v587 = vunpack.c.h.s8.bf16 %v211
    %v588 = vunpack.c.l.s8.bf16 %v212
    %v589 = vunpack.c.l.s8.bf16 %v213
    %v590 = vunpack.c.l.s8.bf16 %v214
    %v591 = vunpack.c.l.s8.bf16 %v215
    %v592 = vunpack.c.l.s8.bf16 %v216
    %v593 = vunpack.c.l.s8.bf16 %v217
    %v594 = vunpack.c.l.s8.bf16 %v218
    %v595 = vunpack.c.l.s8.bf16 %v219
    %v596 = vunpack.c.h.s8.bf16 %v212
    %v597 = vunpack.c.h.s8.bf16 %v213
    %v598 = vunpack.c.h.s8.bf16 %v214
    %v599 = vunpack.c.h.s8.bf16 %v215
    %v600 = vunpack.c.h.s8.bf16 %v216
    %v601 = vunpack.c.h.s8.bf16 %v217
    %v602 = vunpack.c.h.s8.bf16 %v218
    %v603 = vunpack.c.h.s8.bf16 %v219
    %v604 = vunpack.c.l.s8.bf16 %v220
    %v605 = vunpack.c.l.s8.bf16 %v221
    %v606 = vunpack.c.l.s8.bf16 %v222
    %v607 = vunpack.c.l.s8.bf16 %v223
    %v608 = vunpack.c.l.s8.bf16 %v224
    %v609 = vunpack.c.l.s8.bf16 %v225
    %v610 = vunpack.c.l.s8.bf16 %v226
    %v611 = vunpack.c.l.s8.bf16 %v227
    %v612 = vunpack.c.h.s8.bf16 %v220
    %v613 = vunpack.c.h.s8.bf16 %v221
    %v614 = vunpack.c.h.s8.bf16 %v222
    %v615 = vunpack.c.h.s8.bf16 %v223
    %v616 = vunpack.c.h.s8.bf16 %v224
    %v617 = vunpack.c.h.s8.bf16 %v225
    %v618 = vunpack.c.h.s8.bf16 %v226
    %v619 = vunpack.c.h.s8.bf16 %v227
    %v620 = vunpack.c.l.s8.bf16 %v228
    %v621 = vunpack.c.l.s8.bf16 %v229
    %v622 = vunpack.c.l.s8.bf16 %v230
    %v623 = vunpack.c.l.s8.bf16 %v231
    %v624 = vunpack.c.l.s8.bf16 %v232
    %v625 = vunpack.c.l.s8.bf16 %v233
    %v626 = vunpack.c.l.s8.bf16 %v234
    %v627 = vunpack.c.l.s8.bf16 %v235
    %v628 = vunpack.c.h.s8.bf16 %v228
    %v629 = vunpack.c.h.s8.bf16 %v229
    %v630 = vunpack.c.h.s8.bf16 %v230
    %v631 = vunpack.c.h.s8.bf16 %v231
    %v632 = vunpack.c.h.s8.bf16 %v232
    %v633 = vunpack.c.h.s8.bf16 %v233
    %v634 = vunpack.c.h.s8.bf16 %v234
    %v635 = vunpack.c.h.s8.bf16 %v235
    %v636 = vunpack.c.l.s8.bf16 %v236
    %v637 = vunpack.c.l.s8.bf16 %v237
    %v638 = vunpack.c.l.s8.bf16 %v238
    %v639 = vunpack.c.l.s8.bf16 %v239
    %v640 = vunpack.c.l.s8.bf16 %v240
    %v641 = vunpack.c.l.s8.bf16 %v241
    %v642 = vunpack.c.l.s8.bf16 %v242
    %v643 = vunpack.c.l.s8.bf16 %v243
    %v644 = vunpack.c.h.s8.bf16 %v236
    %v645 = vunpack.c.h.s8.bf16 %v237
    %v646 = vunpack.c.h.s8.bf16 %v238
    %v647 = vunpack.c.h.s8.bf16 %v239
    %v648 = vunpack.c.h.s8.bf16 %v240
    %v649 = vunpack.c.h.s8.bf16 %v241
    %v650 = vunpack.c.h.s8.bf16 %v242
    %v651 = vunpack.c.h.s8.bf16 %v243
    %v652 = vunpack.c.l.s8.bf16 %v244
    %v653 = vunpack.c.l.s8.bf16 %v245
    %v654 = vunpack.c.l.s8.bf16 %v246
    %v655 = vunpack.c.l.s8.bf16 %v247
    %v656 = vunpack.c.l.s8.bf16 %v248
    %v657 = vunpack.c.l.s8.bf16 %v249
    %v658 = vunpack.c.l.s8.bf16 %v250
    %v659 = vunpack.c.l.s8.bf16 %v251
    %v660 = vunpack.c.h.s8.bf16 %v244
    %v661 = vunpack.c.h.s8.bf16 %v245
    %v662 = vunpack.c.h.s8.bf16 %v246
    %v663 = vunpack.c.h.s8.bf16 %v247
    %v664 = vunpack.c.h.s8.bf16 %v248
    %v665 = vunpack.c.h.s8.bf16 %v249
    %v666 = vunpack.c.h.s8.bf16 %v250
    %v667 = vunpack.c.h.s8.bf16 %v251
    %v668 = vunpack.c.l.s8.bf16 %v252
    %v669 = vunpack.c.l.s8.bf16 %v253
    %v670 = vunpack.c.l.s8.bf16 %v254
    %v671 = vunpack.c.l.s8.bf16 %v255
    %v672 = vunpack.c.l.s8.bf16 %v256
    %v673 = vunpack.c.l.s8.bf16 %v257
    %v674 = vunpack.c.l.s8.bf16 %v258
    %v675 = vunpack.c.l.s8.bf16 %v259
    %v676 = vunpack.c.h.s8.bf16 %v252
    %v677 = vunpack.c.h.s8.bf16 %v253
    %v678 = vunpack.c.h.s8.bf16 %v254
    %v679 = vunpack.c.h.s8.bf16 %v255
    %v680 = vunpack.c.h.s8.bf16 %v256
    %v681 = vunpack.c.h.s8.bf16 %v257
    %v682 = vunpack.c.h.s8.bf16 %v258
    %v683 = vunpack.c.h.s8.bf16 %v259
    %v684 = vunpack.c.l.s8.bf16 %v260
    %v685 = vunpack.c.l.s8.bf16 %v261
    %v686 = vunpack.c.l.s8.bf16 %v262
    %v687 = vunpack.c.l.s8.bf16 %v263
    %v688 = vunpack.c.l.s8.bf16 %v264
    %v689 = vunpack.c.l.s8.bf16 %v265
    %v690 = vunpack.c.l.s8.bf16 %v266
    %v691 = vunpack.c.l.s8.bf16 %v267
    %v692 = vunpack.c.h.s8.bf16 %v260
    %v693 = vunpack.c.h.s8.bf16 %v261
    %v694 = vunpack.c.h.s8.bf16 %v262
    %v695 = vunpack.c.h.s8.bf16 %v263
    %v696 = vunpack.c.h.s8.bf16 %v264
    %v697 = vunpack.c.h.s8.bf16 %v265
    %v698 = vunpack.c.h.s8.bf16 %v266
    %v699 = vunpack.c.h.s8.bf16 %v267
    %v700 = vunpack.c.l.s8.bf16 %v268
    %v701 = vunpack.c.l.s8.bf16 %v269
    %v702 = vunpack.c.l.s8.bf16 %v270
    %v703 = vunpack.c.l.s8.bf16 %v271
    %v704 = vunpack.c.l.s8.bf16 %v272
    %v705 = vunpack.c.l.s8.bf16 %v273
    %v706 = vunpack.c.l.s8.bf16 %v274
    %v707 = vunpack.c.l.s8.bf16 %v275
    %v708 = vunpack.c.h.s8.bf16 %v268
    %v709 = vunpack.c.h.s8.bf16 %v269
    %v710 = vunpack.c.h.s8.bf16 %v270
    %v711 = vunpack.c.h.s8.bf16 %v271
    %v712 = vunpack.c.h.s8.bf16 %v272
    %v713 = vunpack.c.h.s8.bf16 %v273
    %v714 = vunpack.c.h.s8.bf16 %v274
    %v715 = vunpack.c.h.s8.bf16 %v275
    %v716 = vunpack.c.l.s8.bf16 %v276
    %v717 = vunpack.c.l.s8.bf16 %v277
    %v718 = vunpack.c.l.s8.bf16 %v278
    %v719 = vunpack.c.l.s8.bf16 %v279
    %v720 = vunpack.c.l.s8.bf16 %v280
    %v721 = vunpack.c.l.s8.bf16 %v281
    %v722 = vunpack.c.l.s8.bf16 %v282
    %v723 = vunpack.c.l.s8.bf16 %v283
    %v724 = vunpack.c.h.s8.bf16 %v276
    %v725 = vunpack.c.h.s8.bf16 %v277
    %v726 = vunpack.c.h.s8.bf16 %v278
    %v727 = vunpack.c.h.s8.bf16 %v279
    %v728 = vunpack.c.h.s8.bf16 %v280
    %v729 = vunpack.c.h.s8.bf16 %v281
    %v730 = vunpack.c.h.s8.bf16 %v282
    %v731 = vunpack.c.h.s8.bf16 %v283
    %v732 = vunpack.c.l.s8.bf16 %v284
    %v733 = vunpack.c.l.s8.bf16 %v285
    %v734 = vunpack.c.l.s8.bf16 %v286
    %v735 = vunpack.c.l.s8.bf16 %v287
    %v736 = vunpack.c.l.s8.bf16 %v288
    %v737 = vunpack.c.l.s8.bf16 %v289
    %v738 = vunpack.c.l.s8.bf16 %v290
    %v739 = vunpack.c.l.s8.bf16 %v291
    %v740 = vunpack.c.h.s8.bf16 %v284
    %v741 = vunpack.c.h.s8.bf16 %v285
    %v742 = vunpack.c.h.s8.bf16 %v286
    %v743 = vunpack.c.h.s8.bf16 %v287
    %v744 = vunpack.c.h.s8.bf16 %v288
    %v745 = vunpack.c.h.s8.bf16 %v289
    %v746 = vunpack.c.h.s8.bf16 %v290
    %v747 = vunpack.c.h.s8.bf16 %v291
    %v748 = vunpack.c.l.s8.bf16 %v292
    %v749 = vunpack.c.l.s8.bf16 %v293
    %v750 = vunpack.c.l.s8.bf16 %v294
    %v751 = vunpack.c.l.s8.bf16 %v295
    %v752 = vunpack.c.l.s8.bf16 %v296
    %v753 = vunpack.c.l.s8.bf16 %v297
    %v754 = vunpack.c.l.s8.bf16 %v298
    %v755 = vunpack.c.l.s8.bf16 %v299
    %v756 = vunpack.c.h.s8.bf16 %v292
    %v757 = vunpack.c.h.s8.bf16 %v293
    %v758 = vunpack.c.h.s8.bf16 %v294
    %v759 = vunpack.c.h.s8.bf16 %v295
    %v760 = vunpack.c.h.s8.bf16 %v296
    %v761 = vunpack.c.h.s8.bf16 %v297
    %v762 = vunpack.c.h.s8.bf16 %v298
    %v763 = vunpack.c.h.s8.bf16 %v299
    %v764 = vunpack.c.l.s8.bf16 %v300
    %v765 = vunpack.c.l.s8.bf16 %v301
    %v766 = vunpack.c.l.s8.bf16 %v302
    %v767 = vunpack.c.l.s8.bf16 %v303
    %v768 = vunpack.c.l.s8.bf16 %v304
    %v769 = vunpack.c.l.s8.bf16 %v305
    %v770 = vunpack.c.l.s8.bf16 %v306
    %v771 = vunpack.c.l.s8.bf16 %v307
    %v772 = vunpack.c.h.s8.bf16 %v300
    %v773 = vunpack.c.h.s8.bf16 %v301
    %v774 = vunpack.c.h.s8.bf16 %v302
    %v775 = vunpack.c.h.s8.bf16 %v303
    %v776 = vunpack.c.h.s8.bf16 %v304
    %v777 = vunpack.c.h.s8.bf16 %v305
    %v778 = vunpack.c.h.s8.bf16 %v306
    %v779 = vunpack.c.h.s8.bf16 %v307
    %v780 = vunpack.c.l.s8.bf16 %v308
    %v781 = vunpack.c.l.s8.bf16 %v309
    %v782 = vunpack.c.l.s8.bf16 %v310
    %v783 = vunpack.c.l.s8.bf16 %v311
    %v784 = vunpack.c.l.s8.bf16 %v312
    %v785 = vunpack.c.l.s8.bf16 %v313
    %v786 = vunpack.c.l.s8.bf16 %v314
    %v787 = vunpack.c.l.s8.bf16 %v315
    %v788 = vunpack.c.h.s8.bf16 %v308
    %v789 = vunpack.c.h.s8.bf16 %v309
    %v790 = vunpack.c.h.s8.bf16 %v310
    %v791 = vunpack.c.h.s8.bf16 %v311
    %v792 = vunpack.c.h.s8.bf16 %v312
    %v793 = vunpack.c.h.s8.bf16 %v313
    %v794 = vunpack.c.h.s8.bf16 %v314
    %v795 = vunpack.c.h.s8.bf16 %v315
    %v796 = vunpack.c.l.s8.bf16 %v316
    %v797 = vunpack.c.l.s8.bf16 %v317
    %v798 = vunpack.c.l.s8.bf16 %v318
    %v799 = vunpack.c.l.s8.bf16 %v319
    %v800 = vunpack.c.l.s8.bf16 %v320
    %v801 = vunpack.c.l.s8.bf16 %v321
    %v802 = vunpack.c.l.s8.bf16 %v322
    %v803 = vunpack.c.l.s8.bf16 %v323
    %v804 = vunpack.c.h.s8.bf16 %v316
    %v805 = vunpack.c.h.s8.bf16 %v317
    %v806 = vunpack.c.h.s8.bf16 %v318
    %v807 = vunpack.c.h.s8.bf16 %v319
    %v808 = vunpack.c.h.s8.bf16 %v320
    %v809 = vunpack.c.h.s8.bf16 %v321
    %v810 = vunpack.c.h.s8.bf16 %v322
    %v811 = vunpack.c.h.s8.bf16 %v323
    %v812 = vunpack.c.l.s8.bf16 %v324
    %v813 = vunpack.c.l.s8.bf16 %v325
    %v814 = vunpack.c.l.s8.bf16 %v326
    %v815 = vunpack.c.l.s8.bf16 %v327
    %v816 = vunpack.c.l.s8.bf16 %v328
    %v817 = vunpack.c.l.s8.bf16 %v329
    %v818 = vunpack.c.l.s8.bf16 %v330
    %v819 = vunpack.c.l.s8.bf16 %v331
    %v820 = vunpack.c.h.s8.bf16 %v324
    %v821 = vunpack.c.h.s8.bf16 %v325
    %v822 = vunpack.c.h.s8.bf16 %v326
    %v823 = vunpack.c.h.s8.bf16 %v327
    %v824 = vunpack.c.h.s8.bf16 %v328
    %v825 = vunpack.c.h.s8.bf16 %v329
    %v826 = vunpack.c.h.s8.bf16 %v330
    %v827 = vunpack.c.h.s8.bf16 %v331
    %v828 = vunpack.c.l.s8.bf16 %v332
    %v829 = vunpack.c.l.s8.bf16 %v333
    %v830 = vunpack.c.l.s8.bf16 %v334
    %v831 = vunpack.c.l.s8.bf16 %v335
    %v832 = vunpack.c.l.s8.bf16 %v336
    %v833 = vunpack.c.l.s8.bf16 %v337
    %v834 = vunpack.c.l.s8.bf16 %v338
    %v835 = vunpack.c.l.s8.bf16 %v339
    %v836 = vunpack.c.h.s8.bf16 %v332
    %v837 = vunpack.c.h.s8.bf16 %v333
    %v838 = vunpack.c.h.s8.bf16 %v334
    %v839 = vunpack.c.h.s8.bf16 %v335
    %v840 = vunpack.c.h.s8.bf16 %v336
    %v841 = vunpack.c.h.s8.bf16 %v337
    %v842 = vunpack.c.h.s8.bf16 %v338
    %v843 = vunpack.c.h.s8.bf16 %v339
    %v844 = vunpack.c.l.s8.bf16 %v340
    %v845 = vunpack.c.l.s8.bf16 %v341
    %v846 = vunpack.c.l.s8.bf16 %v342
    %v847 = vunpack.c.l.s8.bf16 %v343
    %v848 = vunpack.c.l.s8.bf16 %v344
    %v849 = vunpack.c.l.s8.bf16 %v345
    %v850 = vunpack.c.l.s8.bf16 %v346
    %v851 = vunpack.c.l.s8.bf16 %v347
    %v852 = vunpack.c.h.s8.bf16 %v340
    %v853 = vunpack.c.h.s8.bf16 %v341
    %v854 = vunpack.c.h.s8.bf16 %v342
    %v855 = vunpack.c.h.s8.bf16 %v343
    %v856 = vunpack.c.h.s8.bf16 %v344
    %v857 = vunpack.c.h.s8.bf16 %v345
    %v858 = vunpack.c.h.s8.bf16 %v346
    %v859 = vunpack.c.h.s8.bf16 %v347
    %860 = vmatprep.subr.bf16.mxu0 %v349
    %861 = vmatpush1.bf16.msra.mxu0 %v348
    %862 = vmatprep.subr.bf16.mxu0 %v357
    %863 = vmatpush1.bf16.msra.mxu0 %v356
    %864 = vmatprep.subr.bf16.mxu0 %v365
    %865 = vmatpush1.bf16.msra.mxu0 %v364
    %866 = vmatprep.subr.bf16.mxu0 %v373
    %867 = vmatpush1.bf16.msra.mxu0 %v372
    %868 = vmatprep.subr.bf16.mxu0 %v381
    %869 = vmatpush1.bf16.msra.mxu0 %v380
    %870 = vmatprep.subr.bf16.mxu0 %v389
    %871 = vmatpush1.bf16.msra.mxu0 %v388
    %872 = vmatprep.subr.bf16.mxu0 %v397
    %873 = vmatpush1.bf16.msra.mxu0 %v396
    %874 = vmatprep.subr.bf16.mxu0 %v405
    %875 = vmatpush1.bf16.msra.mxu0 %v404
    %876 = vmatprep.subr.bf16.mxu0 %v413
    %877 = vmatpush1.bf16.msra.mxu0 %v412
    %878 = vmatprep.subr.bf16.mxu0 %v421
    %879 = vmatpush1.bf16.msra.mxu0 %v420
    %880 = vmatprep.subr.bf16.mxu0 %v429
    %881 = vmatpush1.bf16.msra.mxu0 %v428
    %882 = vmatprep.subr.bf16.mxu0 %v437
    %883 = vmatpush1.bf16.msra.mxu0 %v436
    %884 = vmatprep.subr.bf16.mxu0 %v445
    %885 = vmatpush1.bf16.msra.mxu0 %v444
    %886 = vmatprep.subr.bf16.mxu0 %v453
    %887 = vmatpush1.bf16.msra.mxu0 %v452
    %888 = vmatprep.subr.bf16.mxu0 %v461
    %889 = vmatpush1.bf16.msra.mxu0 %v460
    %890 = vmatprep.subr.bf16.mxu0 %v469
    %891 = vmatpush1.bf16.msra.mxu0 %v468
    %892 = vmatprep.mubr.bf16.mxu0 %v85
    %893 = vmatmul.mubr.bf16.gmra.mrb[0].mxu0 %v84
    %v894 = vpop.f32.mrb[0].mxu0
    %v895 = vadd.f32 0.0, %v894
    %v896 = vpop.f32.mrb[0].mxu0
    %v897 = vadd.f32 0.0, %v896
    %v898 = vpop.f32.mrb[0].mxu0
    %v899 = vpop.f32.mrb[0].mxu0
    %900 = vdwg.mxu0
    %901 = vmatprep.subr.bf16.mxu0 %v477
    %902 = vmatpush1.bf16.msra.mxu0 %v476
    %903 = vmatprep.subr.bf16.mxu0 %v485
    %904 = vmatpush1.bf16.msra.mxu0 %v484
    %905 = vmatprep.subr.bf16.mxu0 %v493
    %906 = vmatpush1.bf16.msra.mxu0 %v492
    %907 = vmatprep.subr.bf16.mxu0 %v501
    %908 = vmatpush1.bf16.msra.mxu0 %v500
    %909 = vmatprep.subr.bf16.mxu0 %v509
    %910 = vmatpush1.bf16.msra.mxu0 %v508
    %911 = vmatprep.subr.bf16.mxu0 %v517
    %912 = vmatpush1.bf16.msra.mxu0 %v516
    %913 = vmatprep.subr.bf16.mxu0 %v525
    %914 = vmatpush1.bf16.msra.mxu0 %v524
    %915 = vmatprep.subr.bf16.mxu0 %v533
    %916 = vmatpush1.bf16.msra.mxu0 %v532
    %917 = vmatprep.subr.bf16.mxu0 %v541
    %918 = vmatpush1.bf16.msra.mxu0 %v540
    %919 = vmatprep.subr.bf16.mxu0 %v549
    %920 = vmatpush1.bf16.msra.mxu0 %v548
    %921 = vmatprep.subr.bf16.mxu0 %v557
    %922 = vmatpush1.bf16.msra.mxu0 %v556
    %923 = vmatprep.subr.bf16.mxu0 %v565
    %924 = vmatpush1.bf16.msra.mxu0 %v564
    %925 = vmatprep.subr.bf16.mxu0 %v573
    %926 = vmatpush1.bf16.msra.mxu0 %v572
    %927 = vmatprep.subr.bf16.mxu0 %v581
    %928 = vmatpush1.bf16.msra.mxu0 %v580
    %929 = vmatprep.subr.bf16.mxu0 %v589
    %930 = vmatpush1.bf16.msra.mxu0 %v588
    %931 = vmatprep.subr.bf16.mxu0 %v597
    %932 = vmatpush1.bf16.msra.mxu0 %v596
    %933 = vmatprep.mubr.bf16.mxu0 %v87
    %934 = vmatmul.mubr.bf16.gmra.mrb[0].mxu0 %v86
    %v935 = vpop.f32.mrb[0].mxu0
    %v936 = vadd.f32 %v895, %v935
    %v937 = vpop.f32.mrb[0].mxu0
    %v938 = vadd.f32 %v897, %v937
    %v939 = vpop.f32.mrb[0].mxu0
    %v940 = vpop.f32.mrb[0].mxu0
    %941 = vdwg.mxu0
    %942 = vmatprep.subr.bf16.mxu0 %v605
    %943 = vmatpush1.bf16.msra.mxu0 %v604
    %944 = vmatprep.subr.bf16.mxu0 %v613
    %945 = vmatpush1.bf16.msra.mxu0 %v612
    %946 = vmatprep.subr.bf16.mxu0 %v621
    %947 = vmatpush1.bf16.msra.mxu0 %v620
    %948 = vmatprep.subr.bf16.mxu0 %v629
    %949 = vmatpush1.bf16.msra.mxu0 %v628
    %950 = vmatprep.subr.bf16.mxu0 %v637
    %951 = vmatpush1.bf16.msra.mxu0 %v636
    %952 = vmatprep.subr.bf16.mxu0 %v645
    %953 = vmatpush1.bf16.msra.mxu0 %v644
    %954 = vmatprep.subr.bf16.mxu0 %v653
    %955 = vmatpush1.bf16.msra.mxu0 %v652
    %956 = vmatprep.subr.bf16.mxu0 %v661
    %957 = vmatpush1.bf16.msra.mxu0 %v660
    %958 = vmatprep.subr.bf16.mxu0 %v669
    %959 = vmatpush1.bf16.msra.mxu0 %v668
    %960 = vmatprep.subr.bf16.mxu0 %v677
    %961 = vmatpush1.bf16.msra.mxu0 %v676
    %962 = vmatprep.subr.bf16.mxu0 %v685
    %963 = vmatpush1.bf16.msra.mxu0 %v684
    %964 = vmatprep.subr.bf16.mxu0 %v693
    %965 = vmatpush1.bf16.msra.mxu0 %v692
    %966 = vmatprep.subr.bf16.mxu0 %v701
    %967 = vmatpush1.bf16.msra.mxu0 %v700
    %968 = vmatprep.subr.bf16.mxu0 %v709
    %969 = vmatpush1.bf16.msra.mxu0 %v708
    %970 = vmatprep.subr.bf16.mxu0 %v717
    %971 = vmatpush1.bf16.msra.mxu0 %v716
    %972 = vmatprep.subr.bf16.mxu0 %v725
    %973 = vmatpush1.bf16.msra.mxu0 %v724
    %974 = vmatprep.mubr.bf16.mxu0 %v89
    %975 = vmatmul.mubr.bf16.gmra.mrb[0].mxu0 %v88
    %v976 = vpop.f32.mrb[0].mxu0
    %v977 = vadd.f32 %v936, %v976
    %v978 = vpop.f32.mrb[0].mxu0
    %v979 = vadd.f32 %v938, %v978
    %v980 = vpop.f32.mrb[0].mxu0
    %v981 = vpop.f32.mrb[0].mxu0
    %982 = vdwg.mxu0
    %983 = vmatprep.subr.bf16.mxu0 %v733
    %984 = vmatpush1.bf16.msra.mxu0 %v732
    %985 = vmatprep.subr.bf16.mxu0 %v741
    %986 = vmatpush1.bf16.msra.mxu0 %v740
    %987 = vmatprep.subr.bf16.mxu0 %v749
    %988 = vmatpush1.bf16.msra.mxu0 %v748
    %989 = vmatprep.subr.bf16.mxu0 %v757
    %990 = vmatpush1.bf16.msra.mxu0 %v756
    %991 = vmatprep.subr.bf16.mxu0 %v765
    %992 = vmatpush1.bf16.msra.mxu0 %v764
    %993 = vmatprep.subr.bf16.mxu0 %v773
    %994 = vmatpush1.bf16.msra.mxu0 %v772
    %995 = vmatprep.subr.bf16.mxu0 %v781
    %996 = vmatpush1.bf16.msra.mxu0 %v780
    %997 = vmatprep.subr.bf16.mxu0 %v789
    %998 = vmatpush1.bf16.msra.mxu0 %v788
    %999 = vmatprep.subr.bf16.mxu0 %v797
    %1000 = vmatpush1.bf16.msra.mxu0 %v796
    %1001 = vmatprep.subr.bf16.mxu0 %v805
    %1002 = vmatpush1.bf16.msra.mxu0 %v804
    %1003 = vmatprep.subr.bf16.mxu0 %v813
    %1004 = vmatpush1.bf16.msra.mxu0 %v812
    %1005 = vmatprep.subr.bf16.mxu0 %v821
    %1006 = vmatpush1.bf16.msra.mxu0 %v820
    %1007 = vmatprep.subr.bf16.mxu0 %v829
    %1008 = vmatpush1.bf16.msra.mxu0 %v828
    %1009 = vmatprep.subr.bf16.mxu0 %v837
    %1010 = vmatpush1.bf16.msra.mxu0 %v836
    %1011 = vmatprep.subr.bf16.mxu0 %v845
    %1012 = vmatpush1.bf16.msra.mxu0 %v844
    %1013 = vmatprep.subr.bf16.mxu0 %v853
    %1014 = vmatpush1.bf16.msra.mxu0 %v852
    %1015 = vmatprep.mubr.bf16.mxu0 %v91
    %1016 = vmatmul.mubr.bf16.gmra.mrb[0].mxu0 %v90
    %v1017 = vpop.f32.mrb[0].mxu0
    %v1018 = vadd.f32 %v977, %v1017
    %v1019 = vpop.f32.mrb[0].mxu0
    %v1020 = vadd.f32 %v979, %v1019
    %v1021 = vpop.f32.mrb[0].mxu0
    %v1022 = vpop.f32.mrb[0].mxu0
    %1023 = vdwg.mxu0
    %1024 = vmatprep.subr.bf16.mxu0 %v351
    %1025 = vmatpush1.bf16.msra.mxu0 %v350
    %1026 = vmatprep.subr.bf16.mxu0 %v359
    %1027 = vmatpush1.bf16.msra.mxu0 %v358
    %1028 = vmatprep.subr.bf16.mxu0 %v367
    %1029 = vmatpush1.bf16.msra.mxu0 %v366
    %1030 = vmatprep.subr.bf16.mxu0 %v375
    %1031 = vmatpush1.bf16.msra.mxu0 %v374
    %1032 = vmatprep.subr.bf16.mxu0 %v383
    %1033 = vmatpush1.bf16.msra.mxu0 %v382
    %1034 = vmatprep.subr.bf16.mxu0 %v391
    %1035 = vmatpush1.bf16.msra.mxu0 %v390
    %1036 = vmatprep.subr.bf16.mxu0 %v399
    %1037 = vmatpush1.bf16.msra.mxu0 %v398
    %1038 = vmatprep.subr.bf16.mxu0 %v407
    %1039 = vmatpush1.bf16.msra.mxu0 %v406
    %1040 = vmatprep.subr.bf16.mxu0 %v415
    %1041 = vmatpush1.bf16.msra.mxu0 %v414
    %1042 = vmatprep.subr.bf16.mxu0 %v423
    %1043 = vmatpush1.bf16.msra.mxu0 %v422
    %1044 = vmatprep.subr.bf16.mxu0 %v431
    %1045 = vmatpush1.bf16.msra.mxu0 %v430
    %1046 = vmatprep.subr.bf16.mxu0 %v439
    %1047 = vmatpush1.bf16.msra.mxu0 %v438
    %1048 = vmatprep.subr.bf16.mxu0 %v447
    %1049 = vmatpush1.bf16.msra.mxu0 %v446
    %1050 = vmatprep.subr.bf16.mxu0 %v455
    %1051 = vmatpush1.bf16.msra.mxu0 %v454
    %1052 = vmatprep.subr.bf16.mxu0 %v463
    %1053 = vmatpush1.bf16.msra.mxu0 %v462
    %1054 = vmatprep.subr.bf16.mxu0 %v471
    %1055 = vmatpush1.bf16.msra.mxu0 %v470
    %1056 = vmatprep.mubr.bf16.mxu0 %v85
    %1057 = vmatmul.mubr.bf16.gmra.mrb[0].mxu0 %v84
    %v1058 = vpop.f32.mrb[0].mxu0
    %v1059 = vadd.f32 0.0, %v1058
    %v1060 = vpop.f32.mrb[0].mxu0
    %v1061 = vadd.f32 0.0, %v1060
    %v1062 = vpop.f32.mrb[0].mxu0
    %v1063 = vpop.f32.mrb[0].mxu0
    %1064 = vdwg.mxu0
    %1065 = vmatprep.subr.bf16.mxu0 %v479
    %1066 = vmatpush1.bf16.msra.mxu0 %v478
    %1067 = vmatprep.subr.bf16.mxu0 %v487
    %1068 = vmatpush1.bf16.msra.mxu0 %v486
    %1069 = vmatprep.subr.bf16.mxu0 %v495
    %1070 = vmatpush1.bf16.msra.mxu0 %v494
    %1071 = vmatprep.subr.bf16.mxu0 %v503
    %1072 = vmatpush1.bf16.msra.mxu0 %v502
    %1073 = vmatprep.subr.bf16.mxu0 %v511
    %1074 = vmatpush1.bf16.msra.mxu0 %v510
    %1075 = vmatprep.subr.bf16.mxu0 %v519
    %1076 = vmatpush1.bf16.msra.mxu0 %v518
    %1077 = vmatprep.subr.bf16.mxu0 %v527
    %1078 = vmatpush1.bf16.msra.mxu0 %v526
    %1079 = vmatprep.subr.bf16.mxu0 %v535
    %1080 = vmatpush1.bf16.msra.mxu0 %v534
    %1081 = vmatprep.subr.bf16.mxu0 %v543
    %1082 = vmatpush1.bf16.msra.mxu0 %v542
    %1083 = vmatprep.subr.bf16.mxu0 %v551
    %1084 = vmatpush1.bf16.msra.mxu0 %v550
    %1085 = vmatprep.subr.bf16.mxu0 %v559
    %1086 = vmatpush1.bf16.msra.mxu0 %v558
    %1087 = vmatprep.subr.bf16.mxu0 %v567
    %1088 = vmatpush1.bf16.msra.mxu0 %v566
    %1089 = vmatprep.subr.bf16.mxu0 %v575
    %1090 = vmatpush1.bf16.msra.mxu0 %v574
    %1091 = vmatprep.subr.bf16.mxu0 %v583
    %1092 = vmatpush1.bf16.msra.mxu0 %v582
    %1093 = vmatprep.subr.bf16.mxu0 %v591
    %1094 = vmatpush1.bf16.msra.mxu0 %v590
    %1095 = vmatprep.subr.bf16.mxu0 %v599
    %1096 = vmatpush1.bf16.msra.mxu0 %v598
    %1097 = vmatprep.mubr.bf16.mxu0 %v87
    %1098 = vmatmul.mubr.bf16.gmra.mrb[0].mxu0 %v86
    %v1099 = vpop.f32.mrb[0].mxu0
    %v1100 = vadd.f32 %v1059, %v1099
    %v1101 = vpop.f32.mrb[0].mxu0
    %v1102 = vadd.f32 %v1061, %v1101
    %v1103 = vpop.f32.mrb[0].mxu0
    %v1104 = vpop.f32.mrb[0].mxu0
    %1105 = vdwg.mxu0
    %1106 = vmatprep.subr.bf16.mxu0 %v607
    %1107 = vmatpush1.bf16.msra.mxu0 %v606
    %1108 = vmatprep.subr.bf16.mxu0 %v615
    %1109 = vmatpush1.bf16.msra.mxu0 %v614
    %1110 = vmatprep.subr.bf16.mxu0 %v623
    %1111 = vmatpush1.bf16.msra.mxu0 %v622
    %1112 = vmatprep.subr.bf16.mxu0 %v631
    %1113 = vmatpush1.bf16.msra.mxu0 %v630
    %1114 = vmatprep.subr.bf16.mxu0 %v639
    %1115 = vmatpush1.bf16.msra.mxu0 %v638
    %1116 = vmatprep.subr.bf16.mxu0 %v647
    %1117 = vmatpush1.bf16.msra.mxu0 %v646
    %1118 = vmatprep.subr.bf16.mxu0 %v655
    %1119 = vmatpush1.bf16.msra.mxu0 %v654
    %1120 = vmatprep.subr.bf16.mxu0 %v663
    %1121 = vmatpush1.bf16.msra.mxu0 %v662
    %1122 = vmatprep.subr.bf16.mxu0 %v671
    %1123 = vmatpush1.bf16.msra.mxu0 %v670
    %1124 = vmatprep.subr.bf16.mxu0 %v679
    %1125 = vmatpush1.bf16.msra.mxu0 %v678
    %1126 = vmatprep.subr.bf16.mxu0 %v687
    %1127 = vmatpush1.bf16.msra.mxu0 %v686
    %1128 = vmatprep.subr.bf16.mxu0 %v695
    %1129 = vmatpush1.bf16.msra.mxu0 %v694
    %1130 = vmatprep.subr.bf16.mxu0 %v703
    %1131 = vmatpush1.bf16.msra.mxu0 %v702
    %1132 = vmatprep.subr.bf16.mxu0 %v711
    %1133 = vmatpush1.bf16.msra.mxu0 %v710
    %1134 = vmatprep.subr.bf16.mxu0 %v719
    %1135 = vmatpush1.bf16.msra.mxu0 %v718
    %1136 = vmatprep.subr.bf16.mxu0 %v727
    %1137 = vmatpush1.bf16.msra.mxu0 %v726
    %1138 = vmatprep.mubr.bf16.mxu0 %v89
    %1139 = vmatmul.mubr.bf16.gmra.mrb[0].mxu0 %v88
    %v1140 = vpop.f32.mrb[0].mxu0
    %v1141 = vadd.f32 %v1100, %v1140
    %v1142 = vpop.f32.mrb[0].mxu0
    %v1143 = vadd.f32 %v1102, %v1142
    %v1144 = vpop.f32.mrb[0].mxu0
    %v1145 = vpop.f32.mrb[0].mxu0
    %1146 = vdwg.mxu0
    %1147 = vmatprep.subr.bf16.mxu0 %v735
    %1148 = vmatpush1.bf16.msra.mxu0 %v734
    %1149 = vmatprep.subr.bf16.mxu0 %v743
    %1150 = vmatpush1.bf16.msra.mxu0 %v742
    %1151 = vmatprep.subr.bf16.mxu0 %v751
    %1152 = vmatpush1.bf16.msra.mxu0 %v750
    %1153 = vmatprep.subr.bf16.mxu0 %v759
    %1154 = vmatpush1.bf16.msra.mxu0 %v758
    %1155 = vmatprep.subr.bf16.mxu0 %v767
    %1156 = vmatpush1.bf16.msra.mxu0 %v766
    %1157 = vmatprep.subr.bf16.mxu0 %v775
    %1158 = vmatpush1.bf16.msra.mxu0 %v774
    %1159 = vmatprep.subr.bf16.mxu0 %v783
    %1160 = vmatpush1.bf16.msra.mxu0 %v782
    %1161 = vmatprep.subr.bf16.mxu0 %v791
    %1162 = vmatpush1.bf16.msra.mxu0 %v790
    %1163 = vmatprep.subr.bf16.mxu0 %v799
    %1164 = vmatpush1.bf16.msra.mxu0 %v798
    %1165 = vmatprep.subr.bf16.mxu0 %v807
    %1166 = vmatpush1.bf16.msra.mxu0 %v806
    %1167 = vmatprep.subr.bf16.mxu0 %v815
    %1168 = vmatpush1.bf16.msra.mxu0 %v814
    %1169 = vmatprep.subr.bf16.mxu0 %v823
    %1170 = vmatpush1.bf16.msra.mxu0 %v822
    %1171 = vmatprep.subr.bf16.mxu0 %v831
    %1172 = vmatpush1.bf16.msra.mxu0 %v830
    %1173 = vmatprep.subr.bf16.mxu0 %v839
    %1174 = vmatpush1.bf16.msra.mxu0 %v838
    %1175 = vmatprep.subr.bf16.mxu0 %v847
    %1176 = vmatpush1.bf16.msra.mxu0 %v846
    %1177 = vmatprep.subr.bf16.mxu0 %v855
    %1178 = vmatpush1.bf16.msra.mxu0 %v854
    %1179 = vmatprep.mubr.bf16.mxu0 %v91
    %1180 = vmatmul.mubr.bf16.gmra.mrb[0].mxu0 %v90
    %v1181 = vpop.f32.mrb[0].mxu0
    %v1182 = vadd.f32 %v1141, %v1181
    %v1183 = vpop.f32.mrb[0].mxu0
    %v1184 = vadd.f32 %v1143, %v1183
    %v1185 = vpop.f32.mrb[0].mxu0
    %v1186 = vpop.f32.mrb[0].mxu0
    %1187 = vdwg.mxu0
    %1188 = vmatprep.subr.bf16.mxu0 %v353
    %1189 = vmatpush1.bf16.msra.mxu0 %v352
    %1190 = vmatprep.subr.bf16.mxu0 %v361
    %1191 = vmatpush1.bf16.msra.mxu0 %v360
    %1192 = vmatprep.subr.bf16.mxu0 %v369
    %1193 = vmatpush1.bf16.msra.mxu0 %v368
    %1194 = vmatprep.subr.bf16.mxu0 %v377
    %1195 = vmatpush1.bf16.msra.mxu0 %v376
    %1196 = vmatprep.subr.bf16.mxu0 %v385
    %1197 = vmatpush1.bf16.msra.mxu0 %v384
    %1198 = vmatprep.subr.bf16.mxu0 %v393
    %1199 = vmatpush1.bf16.msra.mxu0 %v392
    %1200 = vmatprep.subr.bf16.mxu0 %v401
    %1201 = vmatpush1.bf16.msra.mxu0 %v400
    %1202 = vmatprep.subr.bf16.mxu0 %v409
    %1203 = vmatpush1.bf16.msra.mxu0 %v408
    %1204 = vmatprep.subr.bf16.mxu0 %v417
    %1205 = vmatpush1.bf16.msra.mxu0 %v416
    %1206 = vmatprep.subr.bf16.mxu0 %v425
    %1207 = vmatpush1.bf16.msra.mxu0 %v424
    %1208 = vmatprep.subr.bf16.mxu0 %v433
    %1209 = vmatpush1.bf16.msra.mxu0 %v432
    %1210 = vmatprep.subr.bf16.mxu0 %v441
    %1211 = vmatpush1.bf16.msra.mxu0 %v440
    %1212 = vmatprep.subr.bf16.mxu0 %v449
    %1213 = vmatpush1.bf16.msra.mxu0 %v448
    %1214 = vmatprep.subr.bf16.mxu0 %v457
    %1215 = vmatpush1.bf16.msra.mxu0 %v456
    %1216 = vmatprep.subr.bf16.mxu0 %v465
    %1217 = vmatpush1.bf16.msra.mxu0 %v464
    %1218 = vmatprep.subr.bf16.mxu0 %v473
    %1219 = vmatpush1.bf16.msra.mxu0 %v472
    %1220 = vmatprep.mubr.bf16.mxu0 %v85
    %1221 = vmatmul.mubr.bf16.gmra.mrb[0].mxu0 %v84
    %v1222 = vpop.f32.mrb[0].mxu0
    %v1223 = vadd.f32 0.0, %v1222
    %v1224 = vpop.f32.mrb[0].mxu0
    %v1225 = vadd.f32 0.0, %v1224
    %v1226 = vpop.f32.mrb[0].mxu0
    %v1227 = vpop.f32.mrb[0].mxu0
    %1228 = vdwg.mxu0
    %1229 = vmatprep.subr.bf16.mxu0 %v481
    %1230 = vmatpush1.bf16.msra.mxu0 %v480
    %1231 = vmatprep.subr.bf16.mxu0 %v489
    %1232 = vmatpush1.bf16.msra.mxu0 %v488
    %1233 = vmatprep.subr.bf16.mxu0 %v497
    %1234 = vmatpush1.bf16.msra.mxu0 %v496
    %1235 = vmatprep.subr.bf16.mxu0 %v505
    %1236 = vmatpush1.bf16.msra.mxu0 %v504
    %1237 = vmatprep.subr.bf16.mxu0 %v513
    %1238 = vmatpush1.bf16.msra.mxu0 %v512
    %1239 = vmatprep.subr.bf16.mxu0 %v521
    %1240 = vmatpush1.bf16.msra.mxu0 %v520
    %1241 = vmatprep.subr.bf16.mxu0 %v529
    %1242 = vmatpush1.bf16.msra.mxu0 %v528
    %1243 = vmatprep.subr.bf16.mxu0 %v537
    %1244 = vmatpush1.bf16.msra.mxu0 %v536
    %1245 = vmatprep.subr.bf16.mxu0 %v545
    %1246 = vmatpush1.bf16.msra.mxu0 %v544
    %1247 = vmatprep.subr.bf16.mxu0 %v553
    %1248 = vmatpush1.bf16.msra.mxu0 %v552
    %1249 = vmatprep.subr.bf16.mxu0 %v561
    %1250 = vmatpush1.bf16.msra.mxu0 %v560
    %1251 = vmatprep.subr.bf16.mxu0 %v569
    %1252 = vmatpush1.bf16.msra.mxu0 %v568
    %1253 = vmatprep.subr.bf16.mxu0 %v577
    %1254 = vmatpush1.bf16.msra.mxu0 %v576
    %1255 = vmatprep.subr.bf16.mxu0 %v585
    %1256 = vmatpush1.bf16.msra.mxu0 %v584
    %1257 = vmatprep.subr.bf16.mxu0 %v593
    %1258 = vmatpush1.bf16.msra.mxu0 %v592
    %1259 = vmatprep.subr.bf16.mxu0 %v601
    %1260 = vmatpush1.bf16.msra.mxu0 %v600
    %1261 = vmatprep.mubr.bf16.mxu0 %v87
    %1262 = vmatmul.mubr.bf16.gmra.mrb[0].mxu0 %v86
    %v1263 = vpop.f32.mrb[0].mxu0
    %v1264 = vadd.f32 %v1223, %v1263
    %v1265 = vpop.f32.mrb[0].mxu0
    %v1266 = vadd.f32 %v1225, %v1265
    %v1267 = vpop.f32.mrb[0].mxu0
    %v1268 = vpop.f32.mrb[0].mxu0
    %1269 = vdwg.mxu0
    %1270 = vmatprep.subr.bf16.mxu0 %v609
    %1271 = vmatpush1.bf16.msra.mxu0 %v608
    %1272 = vmatprep.subr.bf16.mxu0 %v617
    %1273 = vmatpush1.bf16.msra.mxu0 %v616
    %1274 = vmatprep.subr.bf16.mxu0 %v625
    %1275 = vmatpush1.bf16.msra.mxu0 %v624
    %1276 = vmatprep.subr.bf16.mxu0 %v633
    %1277 = vmatpush1.bf16.msra.mxu0 %v632
    %1278 = vmatprep.subr.bf16.mxu0 %v641
    %1279 = vmatpush1.bf16.msra.mxu0 %v640
    %1280 = vmatprep.subr.bf16.mxu0 %v649
    %1281 = vmatpush1.bf16.msra.mxu0 %v648
    %1282 = vmatprep.subr.bf16.mxu0 %v657
    %1283 = vmatpush1.bf16.msra.mxu0 %v656
    %1284 = vmatprep.subr.bf16.mxu0 %v665
    %1285 = vmatpush1.bf16.msra.mxu0 %v664
    %1286 = vmatprep.subr.bf16.mxu0 %v673
    %1287 = vmatpush1.bf16.msra.mxu0 %v672
    %1288 = vmatprep.subr.bf16.mxu0 %v681
    %1289 = vmatpush1.bf16.msra.mxu0 %v680
    %1290 = vmatprep.subr.bf16.mxu0 %v689
    %1291 = vmatpush1.bf16.msra.mxu0 %v688
    %1292 = vmatprep.subr.bf16.mxu0 %v697
    %1293 = vmatpush1.bf16.msra.mxu0 %v696
    %1294 = vmatprep.subr.bf16.mxu0 %v705
    %1295 = vmatpush1.bf16.msra.mxu0 %v704
    %1296 = vmatprep.subr.bf16.mxu0 %v713
    %1297 = vmatpush1.bf16.msra.mxu0 %v712
    %1298 = vmatprep.subr.bf16.mxu0 %v721
    %1299 = vmatpush1.bf16.msra.mxu0 %v720
    %1300 = vmatprep.subr.bf16.mxu0 %v729
    %1301 = vmatpush1.bf16.msra.mxu0 %v728
    %1302 = vmatprep.mubr.bf16.mxu0 %v89
    %1303 = vmatmul.mubr.bf16.gmra.mrb[0].mxu0 %v88
    %v1304 = vpop.f32.mrb[0].mxu0
    %v1305 = vadd.f32 %v1264, %v1304
    %v1306 = vpop.f32.mrb[0].mxu0
    %v1307 = vadd.f32 %v1266, %v1306
    %v1308 = vpop.f32.mrb[0].mxu0
    %v1309 = vpop.f32.mrb[0].mxu0
    %1310 = vdwg.mxu0
    %1311 = vmatprep.subr.bf16.mxu0 %v737
    %1312 = vmatpush1.bf16.msra.mxu0 %v736
    %1313 = vmatprep.subr.bf16.mxu0 %v745
    %1314 = vmatpush1.bf16.msra.mxu0 %v744
    %1315 = vmatprep.subr.bf16.mxu0 %v753
    %1316 = vmatpush1.bf16.msra.mxu0 %v752
    %1317 = vmatprep.subr.bf16.mxu0 %v761
    %1318 = vmatpush1.bf16.msra.mxu0 %v760
    %1319 = vmatprep.subr.bf16.mxu0 %v769
    %1320 = vmatpush1.bf16.msra.mxu0 %v768
    %1321 = vmatprep.subr.bf16.mxu0 %v777
    %1322 = vmatpush1.bf16.msra.mxu0 %v776
    %1323 = vmatprep.subr.bf16.mxu0 %v785
    %1324 = vmatpush1.bf16.msra.mxu0 %v784
    %1325 = vmatprep.subr.bf16.mxu0 %v793
    %1326 = vmatpush1.bf16.msra.mxu0 %v792
    %1327 = vmatprep.subr.bf16.mxu0 %v801
    %1328 = vmatpush1.bf16.msra.mxu0 %v800
    %1329 = vmatprep.subr.bf16.mxu0 %v809
    %1330 = vmatpush1.bf16.msra.mxu0 %v808
    %1331 = vmatprep.subr.bf16.mxu0 %v817
    %1332 = vmatpush1.bf16.msra.mxu0 %v816
    %1333 = vmatprep.subr.bf16.mxu0 %v825
    %1334 = vmatpush1.bf16.msra.mxu0 %v824
    %1335 = vmatprep.subr.bf16.mxu0 %v833
    %1336 = vmatpush1.bf16.msra.mxu0 %v832
    %1337 = vmatprep.subr.bf16.mxu0 %v841
    %1338 = vmatpush1.bf16.msra.mxu0 %v840
    %1339 = vmatprep.subr.bf16.mxu0 %v849
    %1340 = vmatpush1.bf16.msra.mxu0 %v848
    %1341 = vmatprep.subr.bf16.mxu0 %v857
    %1342 = vmatpush1.bf16.msra.mxu0 %v856
    %1343 = vmatprep.mubr.bf16.mxu0 %v91
    %1344 = vmatmul.mubr.bf16.gmra.mrb[0].mxu0 %v90
    %v1345 = vpop.f32.mrb[0].mxu0
    %v1346 = vadd.f32 %v1305, %v1345
    %v1347 = vpop.f32.mrb[0].mxu0
    %v1348 = vadd.f32 %v1307, %v1347
    %v1349 = vpop.f32.mrb[0].mxu0
    %v1350 = vpop.f32.mrb[0].mxu0
    %1351 = vdwg.mxu0
    %1352 = vmatprep.subr.bf16.mxu0 %v355
    %1353 = vmatpush1.bf16.msra.mxu0 %v354
    %1354 = vmatprep.subr.bf16.mxu0 %v363
    %1355 = vmatpush1.bf16.msra.mxu0 %v362
    %1356 = vmatprep.subr.bf16.mxu0 %v371
    %1357 = vmatpush1.bf16.msra.mxu0 %v370
    %1358 = vmatprep.subr.bf16.mxu0 %v379
    %1359 = vmatpush1.bf16.msra.mxu0 %v378
    %1360 = vmatprep.subr.bf16.mxu0 %v387
    %1361 = vmatpush1.bf16.msra.mxu0 %v386
    %1362 = vmatprep.subr.bf16.mxu0 %v395
    %1363 = vmatpush1.bf16.msra.mxu0 %v394
    %1364 = vmatprep.subr.bf16.mxu0 %v403
    %1365 = vmatpush1.bf16.msra.mxu0 %v402
    %1366 = vmatprep.subr.bf16.mxu0 %v411
    %1367 = vmatpush1.bf16.msra.mxu0 %v410
    %1368 = vmatprep.subr.bf16.mxu0 %v419
    %1369 = vmatpush1.bf16.msra.mxu0 %v418
    %1370 = vmatprep.subr.bf16.mxu0 %v427
    %1371 = vmatpush1.bf16.msra.mxu0 %v426
    %1372 = vmatprep.subr.bf16.mxu0 %v435
    %1373 = vmatpush1.bf16.msra.mxu0 %v434
    %1374 = vmatprep.subr.bf16.mxu0 %v443
    %1375 = vmatpush1.bf16.msra.mxu0 %v442
    %1376 = vmatprep.subr.bf16.mxu0 %v451
    %1377 = vmatpush1.bf16.msra.mxu0 %v450
    %1378 = vmatprep.subr.bf16.mxu0 %v459
    %1379 = vmatpush1.bf16.msra.mxu0 %v458
    %1380 = vmatprep.subr.bf16.mxu0 %v467
    %1381 = vmatpush1.bf16.msra.mxu0 %v466
    %1382 = vmatprep.subr.bf16.mxu0 %v475
    %1383 = vmatpush1.bf16.msra.mxu0 %v474
    %1384 = vmatprep.mubr.bf16.mxu0 %v85
    %1385 = vmatmul.mubr.bf16.gmra.mrb[0].mxu0 %v84
    %v1386 = vpop.f32.mrb[0].mxu0
    %v1387 = vadd.f32 0.0, %v1386
    %v1388 = vpop.f32.mrb[0].mxu0
    %v1389 = vadd.f32 0.0, %v1388
    %v1390 = vpop.f32.mrb[0].mxu0
    %v1391 = vpop.f32.mrb[0].mxu0
    %1392 = vdwg.mxu0
    %1393 = vmatprep.subr.bf16.mxu0 %v483
    %1394 = vmatpush1.bf16.msra.mxu0 %v482
    %1395 = vmatprep.subr.bf16.mxu0 %v491
    %1396 = vmatpush1.bf16.msra.mxu0 %v490
    %1397 = vmatprep.subr.bf16.mxu0 %v499
    %1398 = vmatpush1.bf16.msra.mxu0 %v498
    %1399 = vmatprep.subr.bf16.mxu0 %v507
    %1400 = vmatpush1.bf16.msra.mxu0 %v506
    %1401 = vmatprep.subr.bf16.mxu0 %v515
    %1402 = vmatpush1.bf16.msra.mxu0 %v514
    %1403 = vmatprep.subr.bf16.mxu0 %v523
    %1404 = vmatpush1.bf16.msra.mxu0 %v522
    %1405 = vmatprep.subr.bf16.mxu0 %v531
    %1406 = vmatpush1.bf16.msra.mxu0 %v530
    %1407 = vmatprep.subr.bf16.mxu0 %v539
    %1408 = vmatpush1.bf16.msra.mxu0 %v538
    %1409 = vmatprep.subr.bf16.mxu0 %v547
    %1410 = vmatpush1.bf16.msra.mxu0 %v546
    %1411 = vmatprep.subr.bf16.mxu0 %v555
    %1412 = vmatpush1.bf16.msra.mxu0 %v554
    %1413 = vmatprep.subr.bf16.mxu0 %v563
    %1414 = vmatpush1.bf16.msra.mxu0 %v562
    %1415 = vmatprep.subr.bf16.mxu0 %v571
    %1416 = vmatpush1.bf16.msra.mxu0 %v570
    %1417 = vmatprep.subr.bf16.mxu0 %v579
    %1418 = vmatpush1.bf16.msra.mxu0 %v578
    %1419 = vmatprep.subr.bf16.mxu0 %v587
    %1420 = vmatpush1.bf16.msra.mxu0 %v586
    %1421 = vmatprep.subr.bf16.mxu0 %v595
    %1422 = vmatpush1.bf16.msra.mxu0 %v594
    %1423 = vmatprep.subr.bf16.mxu0 %v603
    %1424 = vmatpush1.bf16.msra.mxu0 %v602
    %1425 = vmatprep.mubr.bf16.mxu0 %v87
    %1426 = vmatmul.mubr.bf16.gmra.mrb[0].mxu0 %v86
    %v1427 = vpop.f32.mrb[0].mxu0
    %v1428 = vadd.f32 %v1387, %v1427
    %v1429 = vpop.f32.mrb[0].mxu0
    %v1430 = vadd.f32 %v1389, %v1429
    %v1431 = vpop.f32.mrb[0].mxu0
    %v1432 = vpop.f32.mrb[0].mxu0
    %1433 = vdwg.mxu0
    %1434 = vmatprep.subr.bf16.mxu0 %v611
    %1435 = vmatpush1.bf16.msra.mxu0 %v610
    %1436 = vmatprep.subr.bf16.mxu0 %v619
    %1437 = vmatpush1.bf16.msra.mxu0 %v618
    %1438 = vmatprep.subr.bf16.mxu0 %v627
    %1439 = vmatpush1.bf16.msra.mxu0 %v626
    %1440 = vmatprep.subr.bf16.mxu0 %v635
    %1441 = vmatpush1.bf16.msra.mxu0 %v634
    %1442 = vmatprep.subr.bf16.mxu0 %v643
    %1443 = vmatpush1.bf16.msra.mxu0 %v642
    %1444 = vmatprep.subr.bf16.mxu0 %v651
    %1445 = vmatpush1.bf16.msra.mxu0 %v650
    %1446 = vmatprep.subr.bf16.mxu0 %v659
    %1447 = vmatpush1.bf16.msra.mxu0 %v658
    %1448 = vmatprep.subr.bf16.mxu0 %v667
    %1449 = vmatpush1.bf16.msra.mxu0 %v666
    %1450 = vmatprep.subr.bf16.mxu0 %v675
    %1451 = vmatpush1.bf16.msra.mxu0 %v674
    %1452 = vmatprep.subr.bf16.mxu0 %v683
    %1453 = vmatpush1.bf16.msra.mxu0 %v682
    %1454 = vmatprep.subr.bf16.mxu0 %v691
    %1455 = vmatpush1.bf16.msra.mxu0 %v690
    %1456 = vmatprep.subr.bf16.mxu0 %v699
    %1457 = vmatpush1.bf16.msra.mxu0 %v698
    %1458 = vmatprep.subr.bf16.mxu0 %v707
    %1459 = vmatpush1.bf16.msra.mxu0 %v706
    %1460 = vmatprep.subr.bf16.mxu0 %v715
    %1461 = vmatpush1.bf16.msra.mxu0 %v714
    %1462 = vmatprep.subr.bf16.mxu0 %v723
    %1463 = vmatpush1.bf16.msra.mxu0 %v722
    %1464 = vmatprep.subr.bf16.mxu0 %v731
    %1465 = vmatpush1.bf16.msra.mxu0 %v730
    %1466 = vmatprep.mubr.bf16.mxu0 %v89
    %1467 = vmatmul.mubr.bf16.gmra.mrb[0].mxu0 %v88
    %v1468 = vpop.f32.mrb[0].mxu0
    %v1469 = vadd.f32 %v1428, %v1468
    %v1470 = vpop.f32.mrb[0].mxu0
    %v1471 = vadd.f32 %v1430, %v1470
    %v1472 = vpop.f32.mrb[0].mxu0
    %v1473 = vpop.f32.mrb[0].mxu0
    %1474 = vdwg.mxu0
    %1475 = vmatprep.subr.bf16.mxu0 %v739
    %1476 = vmatpush1.bf16.msra.mxu0 %v738
    %1477 = vmatprep.subr.bf16.mxu0 %v747
    %1478 = vmatpush1.bf16.msra.mxu0 %v746
    %1479 = vmatprep.subr.bf16.mxu0 %v755
    %1480 = vmatpush1.bf16.msra.mxu0 %v754
    %1481 = vmatprep.subr.bf16.mxu0 %v763
    %1482 = vmatpush1.bf16.msra.mxu0 %v762
    %1483 = vmatprep.subr.bf16.mxu0 %v771
    %1484 = vmatpush1.bf16.msra.mxu0 %v770
    %1485 = vmatprep.subr.bf16.mxu0 %v779
    %1486 = vmatpush1.bf16.msra.mxu0 %v778
    %1487 = vmatprep.subr.bf16.mxu0 %v787
    %1488 = vmatpush1.bf16.msra.mxu0 %v786
    %1489 = vmatprep.subr.bf16.mxu0 %v795
    %1490 = vmatpush1.bf16.msra.mxu0 %v794
    %1491 = vmatprep.subr.bf16.mxu0 %v803
    %1492 = vmatpush1.bf16.msra.mxu0 %v802
    %1493 = vmatprep.subr.bf16.mxu0 %v811
    %1494 = vmatpush1.bf16.msra.mxu0 %v810
    %1495 = vmatprep.subr.bf16.mxu0 %v819
    %1496 = vmatpush1.bf16.msra.mxu0 %v818
    %1497 = vmatprep.subr.bf16.mxu0 %v827
    %1498 = vmatpush1.bf16.msra.mxu0 %v826
    %1499 = vmatprep.subr.bf16.mxu0 %v835
    %1500 = vmatpush1.bf16.msra.mxu0 %v834
    %1501 = vmatprep.subr.bf16.mxu0 %v843
    %1502 = vmatpush1.bf16.msra.mxu0 %v842
    %1503 = vmatprep.subr.bf16.mxu0 %v851
    %1504 = vmatpush1.bf16.msra.mxu0 %v850
    %1505 = vmatprep.subr.bf16.mxu0 %v859
    %1506 = vmatpush1.bf16.msra.mxu0 %v858
    %1507 = vmatprep.mubr.bf16.mxu0 %v91
    %1508 = vmatmul.mubr.bf16.gmra.mrb[0].mxu0 %v90
    %v1509 = vpop.f32.mrb[0].mxu0
    %v1510 = vadd.f32 %v1469, %v1509
    %v1511 = vpop.f32.mrb[0].mxu0
    %v1512 = vadd.f32 %v1471, %v1511
    %v1513 = vpop.f32.mrb[0].mxu0
    %v1514 = vpop.f32.mrb[0].mxu0
    %1515 = vdwg.mxu0
    %v1516 = vld [vmem:[%s2] sm:$0xff]
    %v1518 = vlaneseq
    %v1519 = vshrl.u32 %v1518, 7
    %v1520 = vsub.s32 0, %v1519
    %v1521 = vrot.slane %v1516, %v1520
    %v1522 = vlaneseq
    %v1523 = vshrl.u32 %v1522, 7
    %v1524 = vsub.s32 1, %v1523
    %v1525 = vrot.slane %v1516, %v1524
    %v1526 = vlaneseq
    %v1527 = vshrl.u32 %v1526, 7
    %v1528 = vsub.s32 2, %v1527
    %v1529 = vrot.slane %v1516, %v1528
    %v1530 = vlaneseq
    %v1531 = vshrl.u32 %v1530, 7
    %v1532 = vsub.s32 3, %v1531
    %v1533 = vrot.slane %v1516, %v1532
    %v1534 = vlaneseq
    %v1535 = vshrl.u32 %v1534, 7
    %v1536 = vsub.s32 4, %v1535
    %v1537 = vrot.slane %v1516, %v1536
    %v1538 = vlaneseq
    %v1539 = vshrl.u32 %v1538, 7
    %v1540 = vsub.s32 5, %v1539
    %v1541 = vrot.slane %v1516, %v1540
    %v1542 = vlaneseq
    %v1543 = vshrl.u32 %v1542, 7
    %v1544 = vsub.s32 6, %v1543
    %v1545 = vrot.slane %v1516, %v1544
    %v1546 = vlaneseq
    %v1547 = vshrl.u32 %v1546, 7
    %v1548 = vsub.s32 7, %v1547
    %v1549 = vrot.slane %v1516, %v1548
    %v1558 = vmul.f32 %v1018, %v1521
    %v1559 = vmul.f32 %v1020, %v1525
    %v1560 = vmul.f32 %v1182, %v1529
    %v1561 = vmul.f32 %v1184, %v1533
    %v1562 = vmul.f32 %v1346, %v1537
    %v1563 = vmul.f32 %v1348, %v1541
    %v1564 = vmul.f32 %v1510, %v1545
    %v1565 = vmul.f32 %v1512, %v1549
    %v1566 = vld [vmem:[%s3] sm:$0xff]
    %v1568 = vlaneseq
    %v1569 = vshrl.u32 %v1568, 7
    %v1570 = vsub.s32 0, %v1569
    %v1571 = vrot.slane %v1566, %v1570
    %v1572 = vlaneseq
    %v1573 = vshrl.u32 %v1572, 7
    %v1574 = vsub.s32 1, %v1573
    %v1575 = vrot.slane %v1566, %v1574
    %v1576 = vlaneseq
    %v1577 = vshrl.u32 %v1576, 7
    %v1578 = vsub.s32 2, %v1577
    %v1579 = vrot.slane %v1566, %v1578
    %v1580 = vlaneseq
    %v1581 = vshrl.u32 %v1580, 7
    %v1582 = vsub.s32 3, %v1581
    %v1583 = vrot.slane %v1566, %v1582
    %v1584 = vlaneseq
    %v1585 = vshrl.u32 %v1584, 7
    %v1586 = vsub.s32 4, %v1585
    %v1587 = vrot.slane %v1566, %v1586
    %v1588 = vlaneseq
    %v1589 = vshrl.u32 %v1588, 7
    %v1590 = vsub.s32 5, %v1589
    %v1591 = vrot.slane %v1566, %v1590
    %v1592 = vlaneseq
    %v1593 = vshrl.u32 %v1592, 7
    %v1594 = vsub.s32 6, %v1593
    %v1595 = vrot.slane %v1566, %v1594
    %v1596 = vlaneseq
    %v1597 = vshrl.u32 %v1596, 7
    %v1598 = vsub.s32 7, %v1597
    %v1599 = vrot.slane %v1566, %v1598
    %v1608 = vadd.f32 %v1558, %v1571
    %v1609 = vadd.f32 %v1559, %v1575
    %v1610 = vadd.f32 %v1560, %v1579
    %v1611 = vadd.f32 %v1561, %v1583
    %v1612 = vadd.f32 %v1562, %v1587
    %v1613 = vadd.f32 %v1563, %v1591
    %v1614 = vadd.f32 %v1564, %v1595
    %v1615 = vadd.f32 %v1565, %v1599
    %v1616 = vmax.f32 %v1608, 0.0
    %v1617 = vmax.f32 %v1609, 0.0
    %v1618 = vmax.f32 %v1610, 0.0
    %v1619 = vmax.f32 %v1611, 0.0
    %v1620 = vmax.f32 %v1612, 0.0
    %v1621 = vmax.f32 %v1613, 0.0
    %v1622 = vmax.f32 %v1614, 0.0
    %v1623 = vmax.f32 %v1615, 0.0
    %v1624 = vpack.c.bf16 %v1616, %v1616
    %v1625 = vpack.c.bf16 %v1617, %v1617
    %v1626 = vpack.c.bf16 %v1618, %v1618
    %v1627 = vpack.c.bf16 %v1619, %v1619
    %v1628 = vpack.c.bf16 %v1620, %v1620
    %v1629 = vpack.c.bf16 %v1621, %v1621
    %v1630 = vpack.c.bf16 %v1622, %v1622
    %v1631 = vpack.c.bf16 %v1623, %v1623
    %v1632 = vld [vmem:[%s4] sm:$0xf]
    %v1633 = vld [vmem:[%s4 + $0x4] sm:$0xf]
    %v1634 = vld [vmem:[%s4 + $0x8] sm:$0xf]
    %v1635 = vld [vmem:[%s4 + $0xc] sm:$0xf]
    %v1636 = vld [vmem:[%s4 + $0x10] sm:$0xf]
    %v1637 = vld [vmem:[%s4 + $0x14] sm:$0xf]
    %v1638 = vld [vmem:[%s4 + $0x18] sm:$0xf]
    %v1639 = vld [vmem:[%s4 + $0x1c] sm:$0xf]
    %v1640 = vld [vmem:[%s4 + $0x20] sm:$0xf]
    %v1641 = vld [vmem:[%s4 + $0x24] sm:$0xf]
    %v1642 = vld [vmem:[%s4 + $0x28] sm:$0xf]
    %v1643 = vld [vmem:[%s4 + $0x2c] sm:$0xf]
    %v1644 = vld [vmem:[%s4 + $0x30] sm:$0xf]
    %v1645 = vld [vmem:[%s4 + $0x34] sm:$0xf]
    %v1646 = vld [vmem:[%s4 + $0x38] sm:$0xf]
    %v1647 = vld [vmem:[%s4 + $0x3c] sm:$0xf]
    %v1648 = vld [vmem:[%s4 + $0x40] sm:$0xf]
    %v1649 = vld [vmem:[%s4 + $0x44] sm:$0xf]
    %v1650 = vld [vmem:[%s4 + $0x48] sm:$0xf]
    %v1651 = vld [vmem:[%s4 + $0x4c] sm:$0xf]
    %v1652 = vld [vmem:[%s4 + $0x50] sm:$0xf]
    %v1653 = vld [vmem:[%s4 + $0x54] sm:$0xf]
    %v1654 = vld [vmem:[%s4 + $0x58] sm:$0xf]
    %v1655 = vld [vmem:[%s4 + $0x5c] sm:$0xf]
    %v1656 = vld [vmem:[%s4 + $0x60] sm:$0xf]
    %v1657 = vld [vmem:[%s4 + $0x64] sm:$0xf]
    %v1658 = vld [vmem:[%s4 + $0x68] sm:$0xf]
    %v1659 = vld [vmem:[%s4 + $0x6c] sm:$0xf]
    %v1660 = vld [vmem:[%s4 + $0x70] sm:$0xf]
    %v1661 = vld [vmem:[%s4 + $0x74] sm:$0xf]
    %v1662 = vld [vmem:[%s4 + $0x78] sm:$0xf]
    %v1663 = vld [vmem:[%s4 + $0x7c] sm:$0xf]
    %v1664 = vld [vmem:[%s4 + $0x80] sm:$0xf]
    %v1665 = vld [vmem:[%s4 + $0x84] sm:$0xf]
    %v1666 = vld [vmem:[%s4 + $0x88] sm:$0xf]
    %v1667 = vld [vmem:[%s4 + $0x8c] sm:$0xf]
    %v1668 = vld [vmem:[%s4 + $0x90] sm:$0xf]
    %v1669 = vld [vmem:[%s4 + $0x94] sm:$0xf]
    %v1670 = vld [vmem:[%s4 + $0x98] sm:$0xf]
    %v1671 = vld [vmem:[%s4 + $0x9c] sm:$0xf]
    %v1672 = vld [vmem:[%s4 + $0xa0] sm:$0xf]
    %v1673 = vld [vmem:[%s4 + $0xa4] sm:$0xf]
    %v1674 = vld [vmem:[%s4 + $0xa8] sm:$0xf]
    %v1675 = vld [vmem:[%s4 + $0xac] sm:$0xf]
    %v1676 = vld [vmem:[%s4 + $0xb0] sm:$0xf]
    %v1677 = vld [vmem:[%s4 + $0xb4] sm:$0xf]
    %v1678 = vld [vmem:[%s4 + $0xb8] sm:$0xf]
    %v1679 = vld [vmem:[%s4 + $0xbc] sm:$0xf]
    %v1680 = vld [vmem:[%s4 + $0xc0] sm:$0xf]
    %v1681 = vld [vmem:[%s4 + $0xc4] sm:$0xf]
    %v1682 = vld [vmem:[%s4 + $0xc8] sm:$0xf]
    %v1683 = vld [vmem:[%s4 + $0xcc] sm:$0xf]
    %v1684 = vld [vmem:[%s4 + $0xd0] sm:$0xf]
    %v1685 = vld [vmem:[%s4 + $0xd4] sm:$0xf]
    %v1686 = vld [vmem:[%s4 + $0xd8] sm:$0xf]
    %v1687 = vld [vmem:[%s4 + $0xdc] sm:$0xf]
    %v1688 = vld [vmem:[%s4 + $0xe0] sm:$0xf]
    %v1689 = vld [vmem:[%s4 + $0xe4] sm:$0xf]
    %v1690 = vld [vmem:[%s4 + $0xe8] sm:$0xf]
    %v1691 = vld [vmem:[%s4 + $0xec] sm:$0xf]
    %v1692 = vld [vmem:[%s4 + $0xf0] sm:$0xf]
    %v1693 = vld [vmem:[%s4 + $0xf4] sm:$0xf]
    %v1694 = vld [vmem:[%s4 + $0xf8] sm:$0xf]
    %v1695 = vld [vmem:[%s4 + $0xfc] sm:$0xf]
    %v1696 = vld [vmem:[%s4 + $0x100] sm:$0xf]
    %v1697 = vld [vmem:[%s4 + $0x104] sm:$0xf]
    %v1698 = vld [vmem:[%s4 + $0x108] sm:$0xf]
    %v1699 = vld [vmem:[%s4 + $0x10c] sm:$0xf]
    %v1700 = vld [vmem:[%s4 + $0x110] sm:$0xf]
    %v1701 = vld [vmem:[%s4 + $0x114] sm:$0xf]
    %v1702 = vld [vmem:[%s4 + $0x118] sm:$0xf]
    %v1703 = vld [vmem:[%s4 + $0x11c] sm:$0xf]
    %v1704 = vld [vmem:[%s4 + $0x120] sm:$0xf]
    %v1705 = vld [vmem:[%s4 + $0x124] sm:$0xf]
    %v1706 = vld [vmem:[%s4 + $0x128] sm:$0xf]
    %v1707 = vld [vmem:[%s4 + $0x12c] sm:$0xf]
    %v1708 = vld [vmem:[%s4 + $0x130] sm:$0xf]
    %v1709 = vld [vmem:[%s4 + $0x134] sm:$0xf]
    %v1710 = vld [vmem:[%s4 + $0x138] sm:$0xf]
    %v1711 = vld [vmem:[%s4 + $0x13c] sm:$0xf]
    %v1712 = vld [vmem:[%s4 + $0x140] sm:$0xf]
    %v1713 = vld [vmem:[%s4 + $0x144] sm:$0xf]
    %v1714 = vld [vmem:[%s4 + $0x148] sm:$0xf]
    %v1715 = vld [vmem:[%s4 + $0x14c] sm:$0xf]
    %v1716 = vld [vmem:[%s4 + $0x150] sm:$0xf]
    %v1717 = vld [vmem:[%s4 + $0x154] sm:$0xf]
    %v1718 = vld [vmem:[%s4 + $0x158] sm:$0xf]
    %v1719 = vld [vmem:[%s4 + $0x15c] sm:$0xf]
    %v1720 = vld [vmem:[%s4 + $0x160] sm:$0xf]
    %v1721 = vld [vmem:[%s4 + $0x164] sm:$0xf]
    %v1722 = vld [vmem:[%s4 + $0x168] sm:$0xf]
    %v1723 = vld [vmem:[%s4 + $0x16c] sm:$0xf]
    %v1724 = vld [vmem:[%s4 + $0x170] sm:$0xf]
    %v1725 = vld [vmem:[%s4 + $0x174] sm:$0xf]
    %v1726 = vld [vmem:[%s4 + $0x178] sm:$0xf]
    %v1727 = vld [vmem:[%s4 + $0x17c] sm:$0xf]
    %v1728 = vld [vmem:[%s4 + $0x180] sm:$0xf]
    %v1729 = vld [vmem:[%s4 + $0x184] sm:$0xf]
    %v1730 = vld [vmem:[%s4 + $0x188] sm:$0xf]
    %v1731 = vld [vmem:[%s4 + $0x18c] sm:$0xf]
    %v1732 = vld [vmem:[%s4 + $0x190] sm:$0xf]
    %v1733 = vld [vmem:[%s4 + $0x194] sm:$0xf]
    %v1734 = vld [vmem:[%s4 + $0x198] sm:$0xf]
    %v1735 = vld [vmem:[%s4 + $0x19c] sm:$0xf]
    %v1736 = vld [vmem:[%s4 + $0x1a0] sm:$0xf]
    %v1737 = vld [vmem:[%s4 + $0x1a4] sm:$0xf]
    %v1738 = vld [vmem:[%s4 + $0x1a8] sm:$0xf]
    %v1739 = vld [vmem:[%s4 + $0x1ac] sm:$0xf]
    %v1740 = vld [vmem:[%s4 + $0x1b0] sm:$0xf]
    %v1741 = vld [vmem:[%s4 + $0x1b4] sm:$0xf]
    %v1742 = vld [vmem:[%s4 + $0x1b8] sm:$0xf]
    %v1743 = vld [vmem:[%s4 + $0x1bc] sm:$0xf]
    %v1744 = vld [vmem:[%s4 + $0x1c0] sm:$0xf]
    %v1745 = vld [vmem:[%s4 + $0x1c4] sm:$0xf]
    %v1746 = vld [vmem:[%s4 + $0x1c8] sm:$0xf]
    %v1747 = vld [vmem:[%s4 + $0x1cc] sm:$0xf]
    %v1748 = vld [vmem:[%s4 + $0x1d0] sm:$0xf]
    %v1749 = vld [vmem:[%s4 + $0x1d4] sm:$0xf]
    %v1750 = vld [vmem:[%s4 + $0x1d8] sm:$0xf]
    %v1751 = vld [vmem:[%s4 + $0x1dc] sm:$0xf]
    %v1752 = vld [vmem:[%s4 + $0x1e0] sm:$0xf]
    %v1753 = vld [vmem:[%s4 + $0x1e4] sm:$0xf]
    %v1754 = vld [vmem:[%s4 + $0x1e8] sm:$0xf]
    %v1755 = vld [vmem:[%s4 + $0x1ec] sm:$0xf]
    %v1756 = vld [vmem:[%s4 + $0x1f0] sm:$0xf]
    %v1757 = vld [vmem:[%s4 + $0x1f4] sm:$0xf]
    %v1758 = vld [vmem:[%s4 + $0x1f8] sm:$0xf]
    %v1759 = vld [vmem:[%s4 + $0x1fc] sm:$0xf]
    %v1760 = vld [vmem:[%s5] sm:$0x1]
    %v1762 = vlaneseq
    %v1763 = vshrl.u32 %v1762, 7
    %v1764 = vsub.s32 0, %v1763
    %v1765 = vrot.slane %v1760, %v1764
    %v1895 = vunpack.c.l.b16 %v1632
    %v1896 = vunpack.c.l.b16 %v1633
    %v1897 = vunpack.c.l.b16 %v1634
    %v1898 = vunpack.c.l.b16 %v1635
    %v1899 = vunpack.c.l.b16 %v1636
    %v1900 = vunpack.c.l.b16 %v1637
    %v1901 = vunpack.c.l.b16 %v1638
    %v1902 = vunpack.c.l.b16 %v1639
    %v1903 = vunpack.c.l.b16 %v1640
    %v1904 = vunpack.c.l.b16 %v1641
    %v1905 = vunpack.c.l.b16 %v1642
    %v1906 = vunpack.c.l.b16 %v1643
    %v1907 = vunpack.c.l.b16 %v1644
    %v1908 = vunpack.c.l.b16 %v1645
    %v1909 = vunpack.c.l.b16 %v1646
    %v1910 = vunpack.c.l.b16 %v1647
    %v1911 = vunpack.c.l.b16 %v1648
    %v1912 = vunpack.c.l.b16 %v1649
    %v1913 = vunpack.c.l.b16 %v1650
    %v1914 = vunpack.c.l.b16 %v1651
    %v1915 = vunpack.c.l.b16 %v1652
    %v1916 = vunpack.c.l.b16 %v1653
    %v1917 = vunpack.c.l.b16 %v1654
    %v1918 = vunpack.c.l.b16 %v1655
    %v1919 = vunpack.c.l.b16 %v1656
    %v1920 = vunpack.c.l.b16 %v1657
    %v1921 = vunpack.c.l.b16 %v1658
    %v1922 = vunpack.c.l.b16 %v1659
    %v1923 = vunpack.c.l.b16 %v1660
    %v1924 = vunpack.c.l.b16 %v1661
    %v1925 = vunpack.c.l.b16 %v1662
    %v1926 = vunpack.c.l.b16 %v1663
    %v1927 = vunpack.c.l.b16 %v1664
    %v1928 = vunpack.c.l.b16 %v1665
    %v1929 = vunpack.c.l.b16 %v1666
    %v1930 = vunpack.c.l.b16 %v1667
    %v1931 = vunpack.c.l.b16 %v1668
    %v1932 = vunpack.c.l.b16 %v1669
    %v1933 = vunpack.c.l.b16 %v1670
    %v1934 = vunpack.c.l.b16 %v1671
    %v1935 = vunpack.c.l.b16 %v1672
    %v1936 = vunpack.c.l.b16 %v1673
    %v1937 = vunpack.c.l.b16 %v1674
    %v1938 = vunpack.c.l.b16 %v1675
    %v1939 = vunpack.c.l.b16 %v1676
    %v1940 = vunpack.c.l.b16 %v1677
    %v1941 = vunpack.c.l.b16 %v1678
    %v1942 = vunpack.c.l.b16 %v1679
    %v1943 = vunpack.c.l.b16 %v1680
    %v1944 = vunpack.c.l.b16 %v1681
    %v1945 = vunpack.c.l.b16 %v1682
    %v1946 = vunpack.c.l.b16 %v1683
    %v1947 = vunpack.c.l.b16 %v1684
    %v1948 = vunpack.c.l.b16 %v1685
    %v1949 = vunpack.c.l.b16 %v1686
    %v1950 = vunpack.c.l.b16 %v1687
    %v1951 = vunpack.c.l.b16 %v1688
    %v1952 = vunpack.c.l.b16 %v1689
    %v1953 = vunpack.c.l.b16 %v1690
    %v1954 = vunpack.c.l.b16 %v1691
    %v1955 = vunpack.c.l.b16 %v1692
    %v1956 = vunpack.c.l.b16 %v1693
    %v1957 = vunpack.c.l.b16 %v1694
    %v1958 = vunpack.c.l.b16 %v1695
    %v1959 = vunpack.c.l.b16 %v1696
    %v1960 = vunpack.c.l.b16 %v1697
    %v1961 = vunpack.c.l.b16 %v1698
    %v1962 = vunpack.c.l.b16 %v1699
    %v1963 = vunpack.c.l.b16 %v1700
    %v1964 = vunpack.c.l.b16 %v1701
    %v1965 = vunpack.c.l.b16 %v1702
    %v1966 = vunpack.c.l.b16 %v1703
    %v1967 = vunpack.c.l.b16 %v1704
    %v1968 = vunpack.c.l.b16 %v1705
    %v1969 = vunpack.c.l.b16 %v1706
    %v1970 = vunpack.c.l.b16 %v1707
    %v1971 = vunpack.c.l.b16 %v1708
    %v1972 = vunpack.c.l.b16 %v1709
    %v1973 = vunpack.c.l.b16 %v1710
    %v1974 = vunpack.c.l.b16 %v1711
    %v1975 = vunpack.c.l.b16 %v1712
    %v1976 = vunpack.c.l.b16 %v1713
    %v1977 = vunpack.c.l.b16 %v1714
    %v1978 = vunpack.c.l.b16 %v1715
    %v1979 = vunpack.c.l.b16 %v1716
    %v1980 = vunpack.c.l.b16 %v1717
    %v1981 = vunpack.c.l.b16 %v1718
    %v1982 = vunpack.c.l.b16 %v1719
    %v1983 = vunpack.c.l.b16 %v1720
    %v1984 = vunpack.c.l.b16 %v1721
    %v1985 = vunpack.c.l.b16 %v1722
    %v1986 = vunpack.c.l.b16 %v1723
    %v1987 = vunpack.c.l.b16 %v1724
    %v1988 = vunpack.c.l.b16 %v1725
    %v1989 = vunpack.c.l.b16 %v1726
    %v1990 = vunpack.c.l.b16 %v1727
    %v1991 = vunpack.c.l.b16 %v1728
    %v1992 = vunpack.c.l.b16 %v1729
    %v1993 = vunpack.c.l.b16 %v1730
    %v1994 = vunpack.c.l.b16 %v1731
    %v1995 = vunpack.c.l.b16 %v1732
    %v1996 = vunpack.c.l.b16 %v1733
    %v1997 = vunpack.c.l.b16 %v1734
    %v1998 = vunpack.c.l.b16 %v1735
    %v1999 = vunpack.c.l.b16 %v1736
    %v2000 = vunpack.c.l.b16 %v1737
    %v2001 = vunpack.c.l.b16 %v1738
    %v2002 = vunpack.c.l.b16 %v1739
    %v2003 = vunpack.c.l.b16 %v1740
    %v2004 = vunpack.c.l.b16 %v1741
    %v2005 = vunpack.c.l.b16 %v1742
    %v2006 = vunpack.c.l.b16 %v1743
    %v2007 = vunpack.c.l.b16 %v1744
    %v2008 = vunpack.c.l.b16 %v1745
    %v2009 = vunpack.c.l.b16 %v1746
    %v2010 = vunpack.c.l.b16 %v1747
    %v2011 = vunpack.c.l.b16 %v1748
    %v2012 = vunpack.c.l.b16 %v1749
    %v2013 = vunpack.c.l.b16 %v1750
    %v2014 = vunpack.c.l.b16 %v1751
    %v2015 = vunpack.c.l.b16 %v1752
    %v2016 = vunpack.c.l.b16 %v1753
    %v2017 = vunpack.c.l.b16 %v1754
    %v2018 = vunpack.c.l.b16 %v1755
    %v2019 = vunpack.c.l.b16 %v1756
    %v2020 = vunpack.c.l.b16 %v1757
    %v2021 = vunpack.c.l.b16 %v1758
    %v2022 = vunpack.c.l.b16 %v1759
    %v2023 = vpack.c.b16 %v1896, %v1895
    %v2024 = vpack.c.b16 %v1898, %v1897
    %v2025 = vpack.c.b16 %v1900, %v1899
    %v2026 = vpack.c.b16 %v1902, %v1901
    %v2027 = vpack.c.b16 %v1904, %v1903
    %v2028 = vpack.c.b16 %v1906, %v1905
    %v2029 = vpack.c.b16 %v1908, %v1907
    %v2030 = vpack.c.b16 %v1910, %v1909
    %v2031 = vpack.c.b16 %v1912, %v1911
    %v2032 = vpack.c.b16 %v1914, %v1913
    %v2033 = vpack.c.b16 %v1916, %v1915
    %v2034 = vpack.c.b16 %v1918, %v1917
    %v2035 = vpack.c.b16 %v1920, %v1919
    %v2036 = vpack.c.b16 %v1922, %v1921
    %v2037 = vpack.c.b16 %v1924, %v1923
    %v2038 = vpack.c.b16 %v1926, %v1925
    %v2039 = vpack.c.b16 %v1928, %v1927
    %v2040 = vpack.c.b16 %v1930, %v1929
    %v2041 = vpack.c.b16 %v1932, %v1931
    %v2042 = vpack.c.b16 %v1934, %v1933
    %v2043 = vpack.c.b16 %v1936, %v1935
    %v2044 = vpack.c.b16 %v1938, %v1937
    %v2045 = vpack.c.b16 %v1940, %v1939
    %v2046 = vpack.c.b16 %v1942, %v1941
    %v2047 = vpack.c.b16 %v1944, %v1943
    %v2048 = vpack.c.b16 %v1946, %v1945
    %v2049 = vpack.c.b16 %v1948, %v1947
    %v2050 = vpack.c.b16 %v1950, %v1949
    %v2051 = vpack.c.b16 %v1952, %v1951
    %v2052 = vpack.c.b16 %v1954, %v1953
    %v2053 = vpack.c.b16 %v1956, %v1955
    %v2054 = vpack.c.b16 %v1958, %v1957
    %v2055 = vpack.c.b16 %v1960, %v1959
    %v2056 = vpack.c.b16 %v1962, %v1961
    %v2057 = vpack.c.b16 %v1964, %v1963
    %v2058 = vpack.c.b16 %v1966, %v1965
    %v2059 = vpack.c.b16 %v1968, %v1967
    %v2060 = vpack.c.b16 %v1970, %v1969
    %v2061 = vpack.c.b16 %v1972, %v1971
    %v2062 = vpack.c.b16 %v1974, %v1973
    %v2063 = vpack.c.b16 %v1976, %v1975
    %v2064 = vpack.c.b16 %v1978, %v1977
    %v2065 = vpack.c.b16 %v1980, %v1979
    %v2066 = vpack.c.b16 %v1982, %v1981
    %v2067 = vpack.c.b16 %v1984, %v1983
    %v2068 = vpack.c.b16 %v1986, %v1985
    %v2069 = vpack.c.b16 %v1988, %v1987
    %v2070 = vpack.c.b16 %v1990, %v1989
    %v2071 = vpack.c.b16 %v1992, %v1991
    %v2072 = vpack.c.b16 %v1994, %v1993
    %v2073 = vpack.c.b16 %v1996, %v1995
    %v2074 = vpack.c.b16 %v1998, %v1997
    %v2075 = vpack.c.b16 %v2000, %v1999
    %v2076 = vpack.c.b16 %v2002, %v2001
    %v2077 = vpack.c.b16 %v2004, %v2003
    %v2078 = vpack.c.b16 %v2006, %v2005
    %v2079 = vpack.c.b16 %v2008, %v2007
    %v2080 = vpack.c.b16 %v2010, %v2009
    %v2081 = vpack.c.b16 %v2012, %v2011
    %v2082 = vpack.c.b16 %v2014, %v2013
    %v2083 = vpack.c.b16 %v2016, %v2015
    %v2084 = vpack.c.b16 %v2018, %v2017
    %v2085 = vpack.c.b16 %v2020, %v2019
    %v2086 = vpack.c.b16 %v2022, %v2021
    %2151 = vmatprep.subr.bf16.mxu0 0
    %2152 = vmatpush1.bf16.msra.mxu0 %v2023
    %2153 = vmatprep.subr.bf16.mxu0 0
    %2154 = vmatpush1.bf16.msra.mxu0 %v2024
    %2155 = vmatprep.subr.bf16.mxu0 0
    %2156 = vmatpush1.bf16.msra.mxu0 %v2025
    %2157 = vmatprep.subr.bf16.mxu0 0
    %2158 = vmatpush1.bf16.msra.mxu0 %v2026
    %2159 = vmatprep.subr.bf16.mxu0 0
    %2160 = vmatpush1.bf16.msra.mxu0 %v2027
    %2161 = vmatprep.subr.bf16.mxu0 0
    %2162 = vmatpush1.bf16.msra.mxu0 %v2028
    %2163 = vmatprep.subr.bf16.mxu0 0
    %2164 = vmatpush1.bf16.msra.mxu0 %v2029
    %2165 = vmatprep.subr.bf16.mxu0 0
    %2166 = vmatpush1.bf16.msra.mxu0 %v2030
    %2167 = vmatprep.subr.bf16.mxu0 0
    %2168 = vmatpush1.bf16.msra.mxu0 %v2031
    %2169 = vmatprep.subr.bf16.mxu0 0
    %2170 = vmatpush1.bf16.msra.mxu0 %v2032
    %2171 = vmatprep.subr.bf16.mxu0 0
    %2172 = vmatpush1.bf16.msra.mxu0 %v2033
    %2173 = vmatprep.subr.bf16.mxu0 0
    %2174 = vmatpush1.bf16.msra.mxu0 %v2034
    %2175 = vmatprep.subr.bf16.mxu0 0
    %2176 = vmatpush1.bf16.msra.mxu0 %v2035
    %2177 = vmatprep.subr.bf16.mxu0 0
    %2178 = vmatpush1.bf16.msra.mxu0 %v2036
    %2179 = vmatprep.subr.bf16.mxu0 0
    %2180 = vmatpush1.bf16.msra.mxu0 %v2037
    %2181 = vmatprep.subr.bf16.mxu0 0
    %2182 = vmatpush1.bf16.msra.mxu0 %v2038
    %2183 = vmatprep.mubr.bf16.mxu0 %v1625
    %2184 = vmatmul.mubr.bf16.gmra.mrb[0].mxu0 %v1624
    %v2185 = vpop.f32.mrb[0].mxu0
    %v2186 = vadd.f32 %v1765, %v2185
    %v2187 = vpop.f32.mrb[0].mxu0
    %v2188 = vpop.f32.mrb[0].mxu0
    %v2189 = vpop.f32.mrb[0].mxu0
    %2190 = vdwg.mxu0
    %2191 = vmatprep.subr.bf16.mxu0 0
    %2192 = vmatpush1.bf16.msra.mxu0 %v2039
    %2193 = vmatprep.subr.bf16.mxu0 0
    %2194 = vmatpush1.bf16.msra.mxu0 %v2040
    %2195 = vmatprep.subr.bf16.mxu0 0
    %2196 = vmatpush1.bf16.msra.mxu0 %v2041
    %2197 = vmatprep.subr.bf16.mxu0 0
    %2198 = vmatpush1.bf16.msra.mxu0 %v2042
    %2199 = vmatprep.subr.bf16.mxu0 0
    %2200 = vmatpush1.bf16.msra.mxu0 %v2043
    %2201 = vmatprep.subr.bf16.mxu0 0
    %2202 = vmatpush1.bf16.msra.mxu0 %v2044
    %2203 = vmatprep.subr.bf16.mxu0 0
    %2204 = vmatpush1.bf16.msra.mxu0 %v2045
    %2205 = vmatprep.subr.bf16.mxu0 0
    %2206 = vmatpush1.bf16.msra.mxu0 %v2046
    %2207 = vmatprep.subr.bf16.mxu0 0
    %2208 = vmatpush1.bf16.msra.mxu0 %v2047
    %2209 = vmatprep.subr.bf16.mxu0 0
    %2210 = vmatpush1.bf16.msra.mxu0 %v2048
    %2211 = vmatprep.subr.bf16.mxu0 0
    %2212 = vmatpush1.bf16.msra.mxu0 %v2049
    %2213 = vmatprep.subr.bf16.mxu0 0
    %2214 = vmatpush1.bf16.msra.mxu0 %v2050
    %2215 = vmatprep.subr.bf16.mxu0 0
    %2216 = vmatpush1.bf16.msra.mxu0 %v2051
    %2217 = vmatprep.subr.bf16.mxu0 0
    %2218 = vmatpush1.bf16.msra.mxu0 %v2052
    %2219 = vmatprep.subr.bf16.mxu0 0
    %2220 = vmatpush1.bf16.msra.mxu0 %v2053
    %2221 = vmatprep.subr.bf16.mxu0 0
    %2222 = vmatpush1.bf16.msra.mxu0 %v2054
    %2223 = vmatprep.mubr.bf16.mxu0 %v1627
    %2224 = vmatmul.mubr.bf16.gmra.mrb[0].mxu0 %v1626
    %v2225 = vpop.f32.mrb[0].mxu0
    %v2226 = vadd.f32 %v2186, %v2225
    %v2227 = vpop.f32.mrb[0].mxu0
    %v2228 = vpop.f32.mrb[0].mxu0
    %v2229 = vpop.f32.mrb[0].mxu0
    %2230 = vdwg.mxu0
    %2231 = vmatprep.subr.bf16.mxu0 0
    %2232 = vmatpush1.bf16.msra.mxu0 %v2055
    %2233 = vmatprep.subr.bf16.mxu0 0
    %2234 = vmatpush1.bf16.msra.mxu0 %v2056
    %2235 = vmatprep.subr.bf16.mxu0 0
    %2236 = vmatpush1.bf16.msra.mxu0 %v2057
    %2237 = vmatprep.subr.bf16.mxu0 0
    %2238 = vmatpush1.bf16.msra.mxu0 %v2058
    %2239 = vmatprep.subr.bf16.mxu0 0
    %2240 = vmatpush1.bf16.msra.mxu0 %v2059
    %2241 = vmatprep.subr.bf16.mxu0 0
    %2242 = vmatpush1.bf16.msra.mxu0 %v2060
    %2243 = vmatprep.subr.bf16.mxu0 0
    %2244 = vmatpush1.bf16.msra.mxu0 %v2061
    %2245 = vmatprep.subr.bf16.mxu0 0
    %2246 = vmatpush1.bf16.msra.mxu0 %v2062
    %2247 = vmatprep.subr.bf16.mxu0 0
    %2248 = vmatpush1.bf16.msra.mxu0 %v2063
    %2249 = vmatprep.subr.bf16.mxu0 0
    %2250 = vmatpush1.bf16.msra.mxu0 %v2064
    %2251 = vmatprep.subr.bf16.mxu0 0
    %2252 = vmatpush1.bf16.msra.mxu0 %v2065
    %2253 = vmatprep.subr.bf16.mxu0 0
    %2254 = vmatpush1.bf16.msra.mxu0 %v2066
    %2255 = vmatprep.subr.bf16.mxu0 0
    %2256 = vmatpush1.bf16.msra.mxu0 %v2067
    %2257 = vmatprep.subr.bf16.mxu0 0
    %2258 = vmatpush1.bf16.msra.mxu0 %v2068
    %2259 = vmatprep.subr.bf16.mxu0 0
    %2260 = vmatpush1.bf16.msra.mxu0 %v2069
    %2261 = vmatprep.subr.bf16.mxu0 0
    %2262 = vmatpush1.bf16.msra.mxu0 %v2070
    %2263 = vmatprep.mubr.bf16.mxu0 %v1629
    %2264 = vmatmul.mubr.bf16.gmra.mrb[0].mxu0 %v1628
    %v2265 = vpop.f32.mrb[0].mxu0
    %v2266 = vadd.f32 %v2226, %v2265
    %v2267 = vpop.f32.mrb[0].mxu0
    %v2268 = vpop.f32.mrb[0].mxu0
    %v2269 = vpop.f32.mrb[0].mxu0
    %2270 = vdwg.mxu0
    %2271 = vmatprep.subr.bf16.mxu0 0
    %2272 = vmatpush1.bf16.msra.mxu0 %v2071
    %2273 = vmatprep.subr.bf16.mxu0 0
    %2274 = vmatpush1.bf16.msra.mxu0 %v2072
    %2275 = vmatprep.subr.bf16.mxu0 0
    %2276 = vmatpush1.bf16.msra.mxu0 %v2073
    %2277 = vmatprep.subr.bf16.mxu0 0
    %2278 = vmatpush1.bf16.msra.mxu0 %v2074
    %2279 = vmatprep.subr.bf16.mxu0 0
    %2280 = vmatpush1.bf16.msra.mxu0 %v2075
    %2281 = vmatprep.subr.bf16.mxu0 0
    %2282 = vmatpush1.bf16.msra.mxu0 %v2076
    %2283 = vmatprep.subr.bf16.mxu0 0
    %2284 = vmatpush1.bf16.msra.mxu0 %v2077
    %2285 = vmatprep.subr.bf16.mxu0 0
    %2286 = vmatpush1.bf16.msra.mxu0 %v2078
    %2287 = vmatprep.subr.bf16.mxu0 0
    %2288 = vmatpush1.bf16.msra.mxu0 %v2079
    %2289 = vmatprep.subr.bf16.mxu0 0
    %2290 = vmatpush1.bf16.msra.mxu0 %v2080
    %2291 = vmatprep.subr.bf16.mxu0 0
    %2292 = vmatpush1.bf16.msra.mxu0 %v2081
    %2293 = vmatprep.subr.bf16.mxu0 0
    %2294 = vmatpush1.bf16.msra.mxu0 %v2082
    %2295 = vmatprep.subr.bf16.mxu0 0
    %2296 = vmatpush1.bf16.msra.mxu0 %v2083
    %2297 = vmatprep.subr.bf16.mxu0 0
    %2298 = vmatpush1.bf16.msra.mxu0 %v2084
    %2299 = vmatprep.subr.bf16.mxu0 0
    %2300 = vmatpush1.bf16.msra.mxu0 %v2085
    %2301 = vmatprep.subr.bf16.mxu0 0
    %2302 = vmatpush1.bf16.msra.mxu0 %v2086
    %2303 = vmatprep.mubr.bf16.mxu0 %v1631
    %2304 = vmatmul.mubr.bf16.gmra.mrb[0].mxu0 %v1630
    %v2305 = vpop.f32.mrb[0].mxu0
    %v2306 = vadd.f32 %v2266, %v2305
    %v2307 = vpop.f32.mrb[0].mxu0
    %v2308 = vpop.f32.mrb[0].mxu0
    %v2309 = vpop.f32.mrb[0].mxu0
    %2310 = vdwg.mxu0
    %vm2311 = vcmask 58368
    %2312 = vst.msk [vmem:[%s6] sm:$0x3] %vm2311, %v2306
    // Predicated region
    $region30: #{laftr_forward.1} parent=1 // pred_check
      _
    $region31: #{laftr_forward.1} parent=1 // pred_check_branch
      %2314 = sbr.rel (0) target = $region33
    $region32: #{laftr_forward.1} parent=1 // pred_region
      _
    $region33: #{laftr_forward.1} parent=1 // pred_fallthru
      _
    // Predicated region
    $region34: #{laftr_forward.1} parent=1 // pred_check
      _
    $region35: #{laftr_forward.1} parent=1 // pred_check_branch
      %2316 = sbr.rel (0) target = $region37
    $region36: #{laftr_forward.1} parent=1 // pred_region
      _
    $region37: #{laftr_forward.1} parent=1 // pred_fallthru
      _
    %2317 = vsyncpa [#allocation3], 1

</llo_original>
